<compile_context>
chip_gen: v7x
topology: tpu7x:2x2x1
jax: 0.10.0
libtpu: 0.0.40
codegen_flags: <defaults>
</compile_context>

<pallas_src>
import functools
import numpy as np
import jax
import jax.numpy as jnp
from jax.experimental import pallas as pl
from jax.experimental.pallas import tpu as pltpu


# ----------------------------------------------------------------------------
# Helpers
# ----------------------------------------------------------------------------
def full_spec(shape):
  """BlockSpec covering the whole (small, grid-invariant) array."""
  return pl.BlockSpec(shape, lambda *idx: (0,) * len(shape))


def pick_tile(total, pref):
  """Largest tile <= pref that divides `total` and is a multiple of 128,
  falling back to the full dimension (keeps tiny toy shapes valid)."""
  if total <= pref:
    return total
  for t in range(pref - pref % 128, 0, -128):
    if total % t == 0:
      return t
  return total


def _round_up(x, m):
  return ((x + m - 1) // m) * m


def _vmem_limit_bytes():
  """~48 MiB on v7x (64 MiB physical VMEM), ~100 MiB on v5e/v6e (128 MiB)."""
  try:
    cap = pltpu.get_tpu_info().vmem_capacity_bytes
  except Exception:
    cap = 64 * 1024 * 1024
  return int(min(max(cap - 16 * 1024 * 1024, 32 * 1024 * 1024),
                 100 * 1024 * 1024))


_VMEM_LIMIT = _vmem_limit_bytes()


# ----------------------------------------------------------------------------
# Pallas kernels
# ----------------------------------------------------------------------------
def attn_block_kernel(x_ref, wq_ref, wk_ref, wv_ref, wo_ref, bo_ref,
                      g1_ref, be1_ref, x1_ref,
                      q_sc, k_sc, v_sc, attn_sc, cat_sc,
                      *, heads, head_dim, seq_len):
  """Self-attention + residual + layernorm1 for one batch element."""
  x = x_ref[0]                                   # (L, E) f32
  xb = x.astype(jnp.bfloat16)

  # All-head projections: one (L,E)@(E,E) MXU matmul each (block-diag weights;
  # 1/sqrt(E) already folded into wq).  Results kept only in bf16.
  q = jnp.dot(xb, wq_ref[...],
              preferred_element_type=jnp.float32).astype(jnp.bfloat16)
  k = jnp.dot(xb, wk_ref[...],
              preferred_element_type=jnp.float32).astype(jnp.bfloat16)
  v = jnp.dot(xb, wv_ref[...],
              preferred_element_type=jnp.float32).astype(jnp.bfloat16)

  # Re-layout (L, E) -> (H, L, D) once with STATIC lane offsets, so the
  # per-head loop below only does lane-aligned leading-index reads/writes.
  for h in range(heads):                         # static: cheap copies only
    lo = h * head_dim
    q_sc[h] = q[:, lo:lo + head_dim]
    k_sc[h] = k[:, lo:lo + head_dim]
    v_sc[h] = v[:, lo:lo + head_dim]

  # Additive causal bias built once from skinny iotas (no (L,L) i32 temps).
  row = jax.lax.broadcasted_iota(jnp.int32, (seq_len, 1), 0)
  col = jax.lax.broadcasted_iota(jnp.int32, (1, seq_len), 1)
  bias = jnp.where(row >= col, jnp.float32(0.0), jnp.float32(-1e20))  # (L, L)

  def head_body(h, carry):
    qh = q_sc[h]                                 # (L, D) bf16, lane-aligned
    kh = k_sc[h]
    vh = v_sc[h]
    s = jax.lax.dot_general(qh, kh, (((1,), (1,)), ((), ())),
                            preferred_element_type=jnp.float32)      # (L, L)
    s = s + bias
    m = jnp.max(s, axis=-1, keepdims=True)
    p = jnp.exp(s - m)
    denom = jnp.sum(p, axis=-1, keepdims=True)
    a = (p * pl.reciprocal(denom, approx=True)).astype(jnp.bfloat16)
    attn_sc[h] = jnp.dot(a, vh,
                         preferred_element_type=jnp.float32
                         ).astype(jnp.bfloat16)                       # (L, D)
    return carry

  jax.lax.fori_loop(0, heads, head_body, 0)

  # Gather heads back to (L, E) (static lane offsets), single wo matmul.
  for h in range(heads):                         # static: cheap copies only
    cat_sc[:, h * head_dim:(h + 1) * head_dim] = attn_sc[h]
  attn = jnp.dot(cat_sc[...], wo_ref[...],
                 preferred_element_type=jnp.float32) + bo_ref[...]

  # residual + layernorm1 (f32; rsqrt on the EUP)
  y = attn + x
  mu = jnp.mean(y, axis=-1, keepdims=True)
  var = jnp.mean((y - mu) ** 2, axis=-1, keepdims=True)
  x1_ref[0] = (y - mu) * jax.lax.rsqrt(var + 1e-5) * g1_ref[...] + be1_ref[...]


def ffn_block_kernel(x1_ref, w1_ref, bf1_ref, w2_ref, g2_ref, be2_ref, bf2_ref,
                     out_ref, acc_ref):
  """Feed-forward + residual + layernorm2 on a (TM, E) row block.

  Batch is flattened into the M dimension in the wrapper; the F dimension is
  streamed over grid axis 1 ("arbitrary") with an f32 accumulator in scratch.
  """
  kk = pl.program_id(1)

  @pl.when(kk == 0)
  def _():
    acc_ref[...] = jnp.zeros_like(acc_ref)

  x1 = x1_ref[...]                               # (TM, E) f32
  hidden = jnp.dot(x1.astype(jnp.bfloat16), w1_ref[...],
                   preferred_element_type=jnp.float32) + bf1_ref[...]  # (TM, TF)
  hidden = jnp.maximum(hidden, 0.0)              # ReLU (per-column -> tileable)
  acc_ref[...] += jnp.dot(hidden.astype(jnp.bfloat16), w2_ref[...],
                          preferred_element_type=jnp.float32)          # (TM, E)

  @pl.when(kk == pl.num_programs(1) - 1)
  def _():
    y = acc_ref[...] + bf2_ref[...] + x1
    mu = jnp.mean(y, axis=-1, keepdims=True)
    var = jnp.mean((y - mu) ** 2, axis=-1, keepdims=True)
    out_ref[...] = (y - mu) * jax.lax.rsqrt(var + 1e-5) * g2_ref[...] + be2_ref[...]


def logits_kernel(x_ref, w_ref, b_ref, o_ref):
  """Final projection to (padded) vocab, tiled over M and vocab; bf16 output."""
  o_ref[...] = (jnp.dot(x_ref[...].astype(jnp.bfloat16), w_ref[...],
                        preferred_element_type=jnp.float32)
                + b_ref[...]).astype(o_ref.dtype)


# ----------------------------------------------------------------------------
# Wrappers (pallas_call plumbing)
# ----------------------------------------------------------------------------
def run_attn(x, lp, heads):
  N, L, E = x.shape
  D = E // heads
  kernel = functools.partial(attn_block_kernel, heads=heads, head_dim=D,
                             seq_len=L)
  return pl.pallas_call(
      kernel,
      out_shape=jax.ShapeDtypeStruct((N, L, E), jnp.float32),
      grid=(N,),
      in_specs=[
          pl.BlockSpec((1, L, E), lambda n: (n, 0, 0)),               # x
          full_spec((E, E)), full_spec((E, E)), full_spec((E, E)),    # q/k/v bd
          full_spec((E, E)), full_spec((1, E)),                       # wo, bo
          full_spec((1, E)), full_spec((1, E)),                       # g1, be1
      ],
      out_specs=pl.BlockSpec((1, L, E), lambda n: (n, 0, 0)),
      scratch_shapes=[
          pltpu.VMEM((heads, L, D), jnp.bfloat16),   # q per-head layout
          pltpu.VMEM((heads, L, D), jnp.bfloat16),   # k
          pltpu.VMEM((heads, L, D), jnp.bfloat16),   # v
          pltpu.VMEM((heads, L, D), jnp.bfloat16),   # per-head attention out
          pltpu.VMEM((L, E), jnp.bfloat16),          # concatenated heads
      ],
      compiler_params=pltpu.CompilerParams(
          dimension_semantics=("parallel",),
          vmem_limit_bytes=_VMEM_LIMIT),
  )(x, lp["wq_bd"], lp["wk_bd"], lp["wv_bd"], lp["wo_b"], lp["bo"],
    lp["g1"], lp["be1"])


def run_ffn(x1, lp):
  """x1: (M, E) with M = N*L (batch flattened into the matmul M dimension)."""
  M, E = x1.shape
  F = lp["w1_b"].shape[1]
  tf = pick_tile(F, 1024)
  tm = pick_tile(M, 512)
  return pl.pallas_call(
      ffn_block_kernel,
      out_shape=jax.ShapeDtypeStruct((M, E), jnp.float32),
      grid=(M // tm, F // tf),
      in_specs=[
          pl.BlockSpec((tm, E), lambda m, k: (m, 0)),   # x1 row block
          pl.BlockSpec((E, tf), lambda m, k: (0, k)),   # w1 tile (bf16)
          pl.BlockSpec((1, tf), lambda m, k: (0, k)),   # b1 tile
          pl.BlockSpec((tf, E), lambda m, k: (k, 0)),   # w2 tile (bf16)
          full_spec((1, E)), full_spec((1, E)), full_spec((1, E)),  # g2, be2, b2
      ],
      out_specs=pl.BlockSpec((tm, E), lambda m, k: (m, 0)),
      scratch_shapes=[pltpu.VMEM((tm, E), jnp.float32)],
      compiler_params=pltpu.CompilerParams(
          dimension_semantics=("parallel", "arbitrary"),
          vmem_limit_bytes=_VMEM_LIMIT),
  )(x1, lp["w1_b"], lp["bf1"], lp["w2_b"], lp["g2"], lp["be2"], lp["bf2"])


def run_logits(x, w_b, b):
  """x: (M, E); w_b: (E, Vpad) bf16; returns (M, Vpad) bf16."""
  M, E = x.shape
  Vp = w_b.shape[1]
  tv = pick_tile(Vp, 512)
  tm = pick_tile(M, 512)
  return pl.pallas_call(
      logits_kernel,
      out_shape=jax.ShapeDtypeStruct((M, Vp), jnp.bfloat16),
      grid=(M // tm, Vp // tv),
      in_specs=[pl.BlockSpec((tm, E), lambda m, v: (m, 0)),
                pl.BlockSpec((E, tv), lambda m, v: (0, v)),
                pl.BlockSpec((1, tv), lambda m, v: (0, v))],
      out_specs=pl.BlockSpec((tm, tv), lambda m, v: (m, v)),
      compiler_params=pltpu.CompilerParams(
          dimension_semantics=("parallel", "parallel"),
          vmem_limit_bytes=_VMEM_LIMIT),
  )(x, w_b, b)


def prepare_params(params, heads):
  """Kernel-friendly weights: bf16, block-diagonal q/k/v with 1/sqrt(E) folded
  into wq, and vocab padded to a 128-multiple for lane-dense logits tiles."""
  E = params["word_emb"].shape[1]
  V = params["fc_w"].shape[1]
  Vp = _round_up(V, 128)
  scale = jnp.float32(1.0 / np.sqrt(E))
  eye = jnp.eye(heads, dtype=jnp.float32)
  prep = {
      "word_emb": params["word_emb"],
      "pos_emb": params["pos_emb"],
      "fc_w_b": jnp.pad(params["fc_w"], ((0, 0), (0, Vp - V))
                        ).astype(jnp.bfloat16),
      "fc_b_pad": jnp.pad(params["fc_b"], ((0, 0), (0, Vp - V))),
      "layers": [],
  }
  for lp in params["layers"]:
    prep["layers"].append({
        "wq_bd": (jnp.kron(eye, lp["wq"]) * scale).astype(jnp.bfloat16),
        "wk_bd": jnp.kron(eye, lp["wk"]).astype(jnp.bfloat16),
        "wv_bd": jnp.kron(eye, lp["wv"]).astype(jnp.bfloat16),
        "wo_b": lp["wo"].astype(jnp.bfloat16),
        "bo": lp["bo"], "g1": lp["g1"], "be1": lp["be1"],
        "g2": lp["g2"], "be2": lp["be2"],
        "w1_b": lp["w1"].astype(jnp.bfloat16), "bf1": lp["bf1"],
        "w2_b": lp["w2"].astype(jnp.bfloat16), "bf2": lp["bf2"],
    })
  return prep


@functools.partial(jax.jit, static_argnums=(2,))
def gpt2_forward(tokens, prep, heads):
  """tokens: int32 [N, L] -> logits bfloat16 [N, L, vocab]."""
  N, L = tokens.shape
  E = prep["word_emb"].shape[1]
  V = prep["word_emb"].shape[0]
  # glue: embedding gather + positional embedding (plain JAX)
  x = prep["word_emb"][tokens] + prep["pos_emb"][jnp.arange(L)][None, :, :]
  # TODO(synk): dropout (p=0.1) is identity (eval mode).
  for lp in prep["layers"]:
    x1 = run_attn(x, lp, heads)                               # (N, L, E) f32
    x = run_ffn(x1.reshape(N * L, E), lp).reshape(N, L, E)    # (N, L, E) f32
  logits2d = run_logits(x.reshape(N * L, E),
                        prep["fc_w_b"], prep["fc_b_pad"])     # (N*L, Vpad) bf16
  return logits2d[:, :V].reshape(N, L, V)


# ----------------------------------------------------------------------------
# Pure-JAX f32 reference (for correctness check)
# ----------------------------------------------------------------------------
def ref_block(x, mask, p, heads):
  N, L, E = x.shape
  D = E // heads
  xh = x.reshape(N, L, heads, D)
  q = xh @ p["wq"]
  k = xh @ p["wk"]
  v = xh @ p["wv"]
  e = jnp.einsum('nqhd,nkhd->nhqk', q, k)
  e = jnp.where(mask[None, None] == 0.0, -1e20, e)
  a = jax.nn.softmax(e / jnp.sqrt(jnp.float32(E)), axis=3)
  o = jnp.einsum('nhqk,nkhd->nqhd', a, v).reshape(N, L, E)
  o = o @ p["wo"] + p["bo"][0]

  def ln(v_, g, b):
    mu = v_.mean(-1, keepdims=True)
    var = ((v_ - mu) ** 2).mean(-1, keepdims=True)
    return (v_ - mu) / jnp.sqrt(var + 1e-5) * g[0] + b[0]

  x1 = ln(o + x, p["g1"], p["be1"])
  h1 = jnp.maximum(x1 @ p["w1"] + p["bf1"][0], 0.0)
  ff = h1 @ p["w2"] + p["bf2"][0]
  return ln(ff + x1, p["g2"], p["be2"])


def ref_forward(tokens, params, heads):
  N, L = tokens.shape
  x = params["word_emb"][tokens] + params["pos_emb"][jnp.arange(L)][None, :, :]
  mask = jnp.tril(jnp.ones((L, L), jnp.float32))
  for lp in params["layers"]:
    x = ref_block(x, mask, lp, heads)
  return x @ params["fc_w"] + params["fc_b"][0]


# ----------------------------------------------------------------------------
# Deterministic parameter init
# ----------------------------------------------------------------------------
def init_params(key, vocab, E, num_layers, heads, fwd_exp, max_len):
  D = E // heads
  F = fwd_exp * E
  keys = jax.random.split(key, 3 + num_layers)
  params = {
      "word_emb": jax.random.normal(keys[0], (vocab, E), jnp.float32) * 0.02,
      "pos_emb": jax.random.normal(keys[1], (max_len, E), jnp.float32) * 0.02,
      "fc_w": jax.random.normal(keys[2], (E, vocab), jnp.float32) * 0.02,
      "fc_b": jnp.zeros((1, vocab), jnp.float32),
      "layers": [],
  }
  for i in range(num_layers):
    ks = jax.random.split(keys[3 + i], 8)
    params["layers"].append({
        "wq": jax.random.normal(ks[0], (D, D), jnp.float32) / np.sqrt(D),
        "wk": jax.random.normal(ks[1], (D, D), jnp.float32) / np.sqrt(D),
        "wv": jax.random.normal(ks[2], (D, D), jnp.float32) / np.sqrt(D),
        "wo": jax.random.normal(ks[3], (E, E), jnp.float32) / np.sqrt(E),
        "bo": jax.random.normal(ks[4], (1, E), jnp.float32) * 0.02,
        "g1": jnp.ones((1, E), jnp.float32),
        "be1": jnp.zeros((1, E), jnp.float32),
        "g2": jnp.ones((1, E), jnp.float32),
        "be2": jnp.zeros((1, E), jnp.float32),
        "w1": jax.random.normal(ks[5], (E, F), jnp.float32) / np.sqrt(E),
        "bf1": jax.random.normal(ks[6], (1, F), jnp.float32) * 0.02,
        "w2": jax.random.normal(ks[7], (F, E), jnp.float32) / np.sqrt(F),
        "bf2": jnp.zeros((1, E), jnp.float32),
    })
  return params


# ----------------------------------------------------------------------------
if __name__ == "__main__":
  # small GPT2 config (correctness check; real perf needs (8,128)-sized dims)
  VOCAB = 64
  EMBED = 32
  NUM_LAYERS = 2
  HEADS = 4
  FWD_EXP = 4
  MAX_LEN = 16
  BATCH = 2
  SEQ = 8

  key = jax.random.PRNGKey(0)
  pkey, tkey = jax.random.split(key)
  params = init_params(pkey, VOCAB, EMBED, NUM_LAYERS, HEADS, FWD_EXP, MAX_LEN)
  tokens = jax.random.randint(tkey, (BATCH, SEQ), 0, VOCAB, dtype=jnp.int32)

  prep = prepare_params(params, HEADS)
  logits = gpt2_forward(tokens, prep, HEADS)
  logits = jax.block_until_ready(logits)

  expected = jax.block_until_ready(ref_forward(tokens, params, HEADS))
  assert logits.shape == (BATCH, SEQ, VOCAB)
  # Kernel uses bf16 MXU operands / bf16 logits output (f32 accumulation);
  # reference is pure f32, so allow bf16-level tolerance.
  out_f32 = np.asarray(logits.astype(jnp.float32))
  assert np.allclose(out_f32, np.asarray(expected),
                     atol=2e-2, rtol=2e-2), "Pallas output mismatch vs reference"

  print("KERNEL_OK")
</pallas_src>

<mosaic_0001>
module attributes {stable_mosaic.version = 11 : i64} {
  func.func @ffn_block_kernel(%arg0: i32, %arg1: i32, %arg2: memref<16x32xf32, #tpu.memory_space<vmem>>, %arg3: memref<32x128xbf16, #tpu.memory_space<vmem>>, %arg4: memref<1x128xf32, #tpu.memory_space<vmem>>, %arg5: memref<128x32xbf16, #tpu.memory_space<vmem>>, %arg6: memref<1x32xf32, #tpu.memory_space<vmem>>, %arg7: memref<1x32xf32, #tpu.memory_space<vmem>>, %arg8: memref<1x32xf32, #tpu.memory_space<vmem>>, %arg9: memref<16x32xf32, #tpu.memory_space<vmem>>, %arg10: memref<16x32xf32, #tpu.memory_space<vmem>>) attributes {dimension_semantics = [#tpu.dimension_semantics<parallel>, #tpu.dimension_semantics<arbitrary>], iteration_bounds = array<i64: 1, 1>, scalar_prefetch = 0 : i64, scratch_operands = 1 : i64, tpu.core_type = #tpu.core_type<tc>, window_params = [{transform_indices = @transform_0, window_bounds = array<i64: 16, 32>}, {transform_indices = @transform_1, window_bounds = array<i64: 32, 128>}, {transform_indices = @transform_2, window_bounds = array<i64: 1, 128>}, {transform_indices = @transform_3, window_bounds = array<i64: 128, 32>}, {pipeline_mode = #tpu.pipeline_mode<synchronous>, transform_indices = @transform_4, window_bounds = array<i64: 1, 32>}, {pipeline_mode = #tpu.pipeline_mode<synchronous>, transform_indices = @transform_5, window_bounds = array<i64: 1, 32>}, {pipeline_mode = #tpu.pipeline_mode<synchronous>, transform_indices = @transform_6, window_bounds = array<i64: 1, 32>}, {transform_indices = @transform_7, window_bounds = array<i64: 16, 32>}]} {
    %c0_i32 = arith.constant 0 : i32
    %0 = arith.cmpi eq, %arg1, %c0_i32 : i32
    %1 = arith.extui %0 : i1 to i32
    %c0_i32_0 = arith.constant 0 : i32
    %2 = arith.cmpi ne, %1, %c0_i32_0 : i32
    scf.if %2 {
      %cst_16 = arith.constant 0.000000e+00 : f32
      %21 = vector.broadcast %cst_16 : f32 to vector<16x32xf32>
      %c0_17 = arith.constant 0 : index
      %c0_18 = arith.constant 0 : index
      %22 = vector.load %arg10[%c0_17, %c0_18] : memref<16x32xf32, #tpu.memory_space<vmem>>, vector<16x32xf32>
      tpu.vector_store %arg10[%c0_17, %c0_18], %21 {strides = array<i32>} : memref<16x32xf32, #tpu.memory_space<vmem>>, vector<16x32xf32>,
    } else {
    }
    %c0 = arith.constant 0 : index
    %c0_1 = arith.constant 0 : index
    %3 = vector.load %arg2[%c0, %c0_1] : memref<16x32xf32, #tpu.memory_space<vmem>>, vector<16x32xf32>
    %4 = arith.truncf %3 : vector<16x32xf32> to vector<16x32xbf16>
    %c0_2 = arith.constant 0 : index
    %c0_3 = arith.constant 0 : index
    %5 = vector.load %arg3[%c0_2, %c0_3] : memref<32x128xbf16, #tpu.memory_space<vmem>>, vector<32x128xbf16>
    %cst = arith.constant dense<0.000000e+00> : vector<16x128xf32>
    %6 = tpu.matmul %4, %5, %cst {dimension_numbers = #tpu.dot_dimension_numbers<[1], [0], [0], [1], [0, 0, 1, 1], [], []>} : vector<16x32xbf16>, vector<32x128xbf16>, vector<16x128xf32> -> vector<16x128xf32>
    %c0_4 = arith.constant 0 : index
    %c0_5 = arith.constant 0 : index
    %7 = vector.load %arg4[%c0_4, %c0_5] : memref<1x128xf32, #tpu.memory_space<vmem>>, vector<1x128xf32>
    %8 = vector.broadcast %7 : vector<1x128xf32> to vector<16x128xf32>
    %9 = arith.addf %6, %8 : vector<16x128xf32>
    %cst_6 = arith.constant 0.000000e+00 : f32
    %10 = vector.broadcast %cst_6 : f32 to vector<16x128xf32>
    %11 = arith.maximumf %9, %10 : vector<16x128xf32>
    %c0_7 = arith.constant 0 : index
    %c0_8 = arith.constant 0 : index
    %12 = vector.load %arg10[%c0_7, %c0_8] : memref<16x32xf32, #tpu.memory_space<vmem>>, vector<16x32xf32>
    %13 = arith.truncf %11 : vector<16x128xf32> to vector<16x128xbf16>
    %c0_9 = arith.constant 0 : index
    %c0_10 = arith.constant 0 : index
    %14 = vector.load %arg5[%c0_9, %c0_10] : memref<128x32xbf16, #tpu.memory_space<vmem>>, vector<128x32xbf16>
    %cst_11 = arith.constant dense<0.000000e+00> : vector<16x32xf32>
    %15 = tpu.matmul %13, %14, %cst_11 {dimension_numbers = #tpu.dot_dimension_numbers<[1], [0], [0], [1], [0, 0, 1, 1], [], []>} : vector<16x128xbf16>, vector<128x32xbf16>, vector<16x32xf32> -> vector<16x32xf32>
    %16 = arith.addf %12, %15 : vector<16x32xf32>
    %c0_12 = arith.constant 0 : index
    %c0_13 = arith.constant 0 : index
    %17 = vector.load %arg10[%c0_12, %c0_13] : memref<16x32xf32, #tpu.memory_space<vmem>>, vector<16x32xf32>
    tpu.vector_store %arg10[%c0_12, %c0_13], %16 {strides = array<i32>} : memref<16x32xf32, #tpu.memory_space<vmem>>, vector<16x32xf32>,
    %c0_i32_14 = arith.constant 0 : i32
    %18 = arith.cmpi eq, %arg1, %c0_i32_14 : i32
    %19 = arith.extui %18 : i1 to i32
    %c0_i32_15 = arith.constant 0 : i32
    %20 = arith.cmpi ne, %19, %c0_i32_15 : i32
    scf.if %20 {
      %c0_16 = arith.constant 0 : index
      %c0_17 = arith.constant 0 : index
      %21 = vector.load %arg10[%c0_16, %c0_17] : memref<16x32xf32, #tpu.memory_space<vmem>>, vector<16x32xf32>
      %c0_18 = arith.constant 0 : index
      %c0_19 = arith.constant 0 : index
      %22 = vector.load %arg8[%c0_18, %c0_19] : memref<1x32xf32, #tpu.memory_space<vmem>>, vector<1x32xf32>
      %23 = vector.broadcast %22 : vector<1x32xf32> to vector<16x32xf32>
      %24 = arith.addf %21, %23 : vector<16x32xf32>
      %25 = arith.addf %24, %3 : vector<16x32xf32>
      %cst_20 = arith.constant dense<0.000000e+00> : vector<16xf32>
      %26 = vector.multi_reduction <add>, %25, %cst_20 [1] : vector<16x32xf32> to vector<16xf32>
      %27 = vector.shape_cast %26 : vector<16xf32> to vector<16x1xf32>
      %cst_21 = arith.constant 3.200000e+01 : f32
      %28 = vector.broadcast %cst_21 : f32 to vector<16x1xf32>
      %29 = arith.divf %27, %28 : vector<16x1xf32>
      %30 = vector.broadcast %29 : vector<16x1xf32> to vector<16x32xf32>
      %31 = arith.subf %25, %30 : vector<16x32xf32>
      %32 = arith.mulf %31, %31 : vector<16x32xf32>
      %cst_22 = arith.constant dense<0.000000e+00> : vector<16xf32>
      %33 = vector.multi_reduction <add>, %32, %cst_22 [1] : vector<16x32xf32> to vector<16xf32>
      %34 = vector.shape_cast %33 : vector<16xf32> to vector<16x1xf32>
      %cst_23 = arith.constant 3.200000e+01 : f32
      %35 = vector.broadcast %cst_23 : f32 to vector<16x1xf32>
      %36 = arith.divf %34, %35 : vector<16x1xf32>
      %37 = vector.broadcast %29 : vector<16x1xf32> to vector<16x32xf32>
      %38 = arith.subf %25, %37 : vector<16x32xf32>
      %cst_24 = arith.constant 9.99999974E-6 : f32
      %39 = vector.broadcast %cst_24 : f32 to vector<16x1xf32>
      %40 = arith.addf %36, %39 : vector<16x1xf32>
      %41 = math.rsqrt %40 : vector<16x1xf32>
      %42 = vector.broadcast %41 : vector<16x1xf32> to vector<16x32xf32>
      %43 = arith.mulf %38, %42 : vector<16x32xf32>
      %c0_25 = arith.constant 0 : index
      %c0_26 = arith.constant 0 : index
      %44 = vector.load %arg6[%c0_25, %c0_26] : memref<1x32xf32, #tpu.memory_space<vmem>>, vector<1x32xf32>
      %45 = vector.broadcast %44 : vector<1x32xf32> to vector<16x32xf32>
      %46 = arith.mulf %43, %45 : vector<16x32xf32>
      %c0_27 = arith.constant 0 : index
      %c0_28 = arith.constant 0 : index
      %47 = vector.load %arg7[%c0_27, %c0_28] : memref<1x32xf32, #tpu.memory_space<vmem>>, vector<1x32xf32>
      %48 = vector.broadcast %47 : vector<1x32xf32> to vector<16x32xf32>
      %49 = arith.addf %46, %48 : vector<16x32xf32>
      %c0_29 = arith.constant 0 : index
      %c0_30 = arith.constant 0 : index
      %50 = vector.load %arg9[%c0_29, %c0_30] : memref<16x32xf32, #tpu.memory_space<vmem>>, vector<16x32xf32>
      tpu.vector_store %arg9[%c0_29, %c0_30], %49 {strides = array<i32>} : memref<16x32xf32, #tpu.memory_space<vmem>>, vector<16x32xf32>,
    } else {
    }
    return
  }
  func.func @transform_0(%arg0: i32, %arg1: i32) -> (i32, i32) {
    %c0_i32 = arith.constant 0 : i32
    %c0_i32_0 = arith.constant 0 : i32
    return %arg0, %c0_i32 : i32, i32
  }
  func.func @transform_1(%arg0: i32, %arg1: i32) -> (i32, i32) {
    %c0_i32 = arith.constant 0 : i32
    %c0_i32_0 = arith.constant 0 : i32
    return %c0_i32, %arg1 : i32, i32
  }
  func.func @transform_2(%arg0: i32, %arg1: i32) -> (i32, i32) {
    %c0_i32 = arith.constant 0 : i32
    %c0_i32_0 = arith.constant 0 : i32
    return %c0_i32, %arg1 : i32, i32
  }
  func.func @transform_3(%arg0: i32, %arg1: i32) -> (i32, i32) {
    %c0_i32 = arith.constant 0 : i32
    %c0_i32_0 = arith.constant 0 : i32
    return %arg1, %c0_i32 : i32, i32
  }
  func.func @transform_4(%arg0: i32, %arg1: i32) -> (i32, i32) {
    %c0_i32 = arith.constant 0 : i32
    %c0_i32_0 = arith.constant 0 : i32
    %c0_i32_1 = arith.constant 0 : i32
    return %c0_i32, %c0_i32_0 : i32, i32
  }
  func.func @transform_5(%arg0: i32, %arg1: i32) -> (i32, i32) {
    %c0_i32 = arith.constant 0 : i32
    %c0_i32_0 = arith.constant 0 : i32
    %c0_i32_1 = arith.constant 0 : i32
    return %c0_i32, %c0_i32_0 : i32, i32
  }
  func.func @transform_6(%arg0: i32, %arg1: i32) -> (i32, i32) {
    %c0_i32 = arith.constant 0 : i32
    %c0_i32_0 = arith.constant 0 : i32
    %c0_i32_1 = arith.constant 0 : i32
    return %c0_i32, %c0_i32_0 : i32, i32
  }
  func.func @transform_7(%arg0: i32, %arg1: i32) -> (i32, i32) {
    %c0_i32 = arith.constant 0 : i32
    %c0_i32_0 = arith.constant 0 : i32
    return %arg0, %c0_i32 : i32, i32
  }
}

module attributes {stable_mosaic.version = 11 : i64} {
  func.func @logits_kernel(%arg0: i32, %arg1: i32, %arg2: memref<16x32xf32, #tpu.memory_space<vmem>>, %arg3: memref<32x128xbf16, #tpu.memory_space<vmem>>, %arg4: memref<1x128xf32, #tpu.memory_space<vmem>>, %arg5: memref<16x128xbf16, #tpu.memory_space<vmem>>) attributes {dimension_semantics = [#tpu.dimension_semantics<parallel>, #tpu.dimension_semantics<parallel>], iteration_bounds = array<i64: 1, 1>, scalar_prefetch = 0 : i64, scratch_operands = 0 : i64, tpu.core_type = #tpu.core_type<tc>, window_params = [{transform_indices = @transform_0, window_bounds = array<i64: 16, 32>}, {transform_indices = @transform_1, window_bounds = array<i64: 32, 128>}, {transform_indices = @transform_2, window_bounds = array<i64: 1, 128>}, {transform_indices = @transform_3, window_bounds = array<i64: 16, 128>}]} {
    %c0 = arith.constant 0 : index
    %c0_0 = arith.constant 0 : index
    %0 = vector.load %arg2[%c0, %c0_0] : memref<16x32xf32, #tpu.memory_space<vmem>>, vector<16x32xf32>
    %1 = arith.truncf %0 : vector<16x32xf32> to vector<16x32xbf16>
    %c0_1 = arith.constant 0 : index
    %c0_2 = arith.constant 0 : index
    %2 = vector.load %arg3[%c0_1, %c0_2] : memref<32x128xbf16, #tpu.memory_space<vmem>>, vector<32x128xbf16>
    %cst = arith.constant dense<0.000000e+00> : vector<16x128xf32>
    %3 = tpu.matmul %1, %2, %cst {dimension_numbers = #tpu.dot_dimension_numbers<[1], [0], [0], [1], [0, 0, 1, 1], [], []>} : vector<16x32xbf16>, vector<32x128xbf16>, vector<16x128xf32> -> vector<16x128xf32>
    %c0_3 = arith.constant 0 : index
    %c0_4 = arith.constant 0 : index
    %4 = vector.load %arg4[%c0_3, %c0_4] : memref<1x128xf32, #tpu.memory_space<vmem>>, vector<1x128xf32>
    %5 = vector.broadcast %4 : vector<1x128xf32> to vector<16x128xf32>
    %6 = arith.addf %3, %5 : vector<16x128xf32>
    %7 = arith.truncf %6 : vector<16x128xf32> to vector<16x128xbf16>
    %c0_5 = arith.constant 0 : index
    %c0_6 = arith.constant 0 : index
    %8 = vector.load %arg5[%c0_5, %c0_6] : memref<16x128xbf16, #tpu.memory_space<vmem>>, vector<16x128xbf16>
    tpu.vector_store %arg5[%c0_5, %c0_6], %7 {strides = array<i32>} : memref<16x128xbf16, #tpu.memory_space<vmem>>, vector<16x128xbf16>,
    return
  }
  func.func @transform_0(%arg0: i32, %arg1: i32) -> (i32, i32) {
    %c0_i32 = arith.constant 0 : i32
    %c0_i32_0 = arith.constant 0 : i32
    return %arg0, %c0_i32 : i32, i32
  }
  func.func @transform_1(%arg0: i32, %arg1: i32) -> (i32, i32) {
    %c0_i32 = arith.constant 0 : i32
    %c0_i32_0 = arith.constant 0 : i32
    return %c0_i32, %arg1 : i32, i32
  }
  func.func @transform_2(%arg0: i32, %arg1: i32) -> (i32, i32) {
    %c0_i32 = arith.constant 0 : i32
    %c0_i32_0 = arith.constant 0 : i32
    return %c0_i32, %arg1 : i32, i32
  }
  func.func @transform_3(%arg0: i32, %arg1: i32) -> (i32, i32) {
    %c0_i32 = arith.constant 0 : i32
    return %arg0, %arg1 : i32, i32
  }
}

module attributes {stable_mosaic.version = 11 : i64} {
  func.func @attn_block_kernel(%arg0: i32, %arg1: memref<1x8x32xf32, #tpu.memory_space<vmem>>, %arg2: memref<32x32xbf16, #tpu.memory_space<vmem>>, %arg3: memref<32x32xbf16, #tpu.memory_space<vmem>>, %arg4: memref<32x32xbf16, #tpu.memory_space<vmem>>, %arg5: memref<32x32xbf16, #tpu.memory_space<vmem>>, %arg6: memref<1x32xf32, #tpu.memory_space<vmem>>, %arg7: memref<1x32xf32, #tpu.memory_space<vmem>>, %arg8: memref<1x32xf32, #tpu.memory_space<vmem>>, %arg9: memref<1x8x32xf32, #tpu.memory_space<vmem>>, %arg10: memref<4x8x8xbf16, #tpu.memory_space<vmem>>, %arg11: memref<4x8x8xbf16, #tpu.memory_space<vmem>>, %arg12: memref<4x8x8xbf16, #tpu.memory_space<vmem>>, %arg13: memref<4x8x8xbf16, #tpu.memory_space<vmem>>, %arg14: memref<8x32xbf16, #tpu.memory_space<vmem>>) attributes {dimension_semantics = [#tpu.dimension_semantics<parallel>], iteration_bounds = array<i64: 2>, scalar_prefetch = 0 : i64, scratch_operands = 5 : i64, tpu.core_type = #tpu.core_type<tc>, window_params = [{transform_indices = @transform_0, window_bounds = array<i64: 1, 8, 32>}, {pipeline_mode = #tpu.pipeline_mode<synchronous>, transform_indices = @transform_1, window_bounds = array<i64: 32, 32>}, {pipeline_mode = #tpu.pipeline_mode<synchronous>, transform_indices = @transform_2, window_bounds = array<i64: 32, 32>}, {pipeline_mode = #tpu.pipeline_mode<synchronous>, transform_indices = @transform_3, window_bounds = array<i64: 32, 32>}, {pipeline_mode = #tpu.pipeline_mode<synchronous>, transform_indices = @transform_4, window_bounds = array<i64: 32, 32>}, {pipeline_mode = #tpu.pipeline_mode<synchronous>, transform_indices = @transform_5, window_bounds = array<i64: 1, 32>}, {pipeline_mode = #tpu.pipeline_mode<synchronous>, transform_indices = @transform_6, window_bounds = array<i64: 1, 32>}, {pipeline_mode = #tpu.pipeline_mode<synchronous>, transform_indices = @transform_7, window_bounds = array<i64: 1, 32>}, {transform_indices = @transform_8, window_bounds = array<i64: 1, 8, 32>}]} {
    %c0 = arith.constant 0 : index
    %c0_0 = arith.constant 0 : index
    %c0_1 = arith.constant 0 : index
    %0 = vector.load %arg1[%c0, %c0_0, %c0_1] : memref<1x8x32xf32, #tpu.memory_space<vmem>>, vector<1x8x32xf32>
    %1 = vector.shape_cast %0 : vector<1x8x32xf32> to vector<8x32xf32>
    %2 = arith.truncf %1 : vector<8x32xf32> to vector<8x32xbf16>
    %c0_2 = arith.constant 0 : index
    %c0_3 = arith.constant 0 : index
    %3 = vector.load %arg2[%c0_2, %c0_3] : memref<32x32xbf16, #tpu.memory_space<vmem>>, vector<32x32xbf16>
    %cst = arith.constant dense<0.000000e+00> : vector<8x32xf32>
    %4 = tpu.matmul %2, %3, %cst {dimension_numbers = #tpu.dot_dimension_numbers<[1], [0], [0], [1], [0, 0, 1, 1], [], []>} : vector<8x32xbf16>, vector<32x32xbf16>, vector<8x32xf32> -> vector<8x32xf32>
    %5 = arith.truncf %4 : vector<8x32xf32> to vector<8x32xbf16>
    %c0_4 = arith.constant 0 : index
    %c0_5 = arith.constant 0 : index
    %6 = vector.load %arg3[%c0_4, %c0_5] : memref<32x32xbf16, #tpu.memory_space<vmem>>, vector<32x32xbf16>
    %cst_6 = arith.constant dense<0.000000e+00> : vector<8x32xf32>
    %7 = tpu.matmul %2, %6, %cst_6 {dimension_numbers = #tpu.dot_dimension_numbers<[1], [0], [0], [1], [0, 0, 1, 1], [], []>} : vector<8x32xbf16>, vector<32x32xbf16>, vector<8x32xf32> -> vector<8x32xf32>
    %8 = arith.truncf %7 : vector<8x32xf32> to vector<8x32xbf16>
    %c0_7 = arith.constant 0 : index
    %c0_8 = arith.constant 0 : index
    %9 = vector.load %arg4[%c0_7, %c0_8] : memref<32x32xbf16, #tpu.memory_space<vmem>>, vector<32x32xbf16>
    %cst_9 = arith.constant dense<0.000000e+00> : vector<8x32xf32>
    %10 = tpu.matmul %2, %9, %cst_9 {dimension_numbers = #tpu.dot_dimension_numbers<[1], [0], [0], [1], [0, 0, 1, 1], [], []>} : vector<8x32xbf16>, vector<32x32xbf16>, vector<8x32xf32> -> vector<8x32xf32>
    %11 = arith.truncf %10 : vector<8x32xf32> to vector<8x32xbf16>
    %12 = vector.extract_strided_slice %5 {offsets = [0, 0], sizes = [8, 8], strides = [1, 1]} : vector<8x32xbf16> to vector<8x8xbf16>
    %c0_10 = arith.constant 0 : index
    %c0_11 = arith.constant 0 : index
    %c0_12 = arith.constant 0 : index
    %13 = vector.load %arg10[%c0_10, %c0_11, %c0_12] : memref<4x8x8xbf16, #tpu.memory_space<vmem>>, vector<1x8x8xbf16>
    %14 = vector.shape_cast %13 : vector<1x8x8xbf16> to vector<8x8xbf16>
    %15 = vector.shape_cast %12 : vector<8x8xbf16> to vector<1x8x8xbf16>
    tpu.vector_store %arg10[%c0_10, %c0_11, %c0_12], %15 {strides = array<i32>} : memref<4x8x8xbf16, #tpu.memory_space<vmem>>, vector<1x8x8xbf16>,
    %16 = vector.extract_strided_slice %8 {offsets = [0, 0], sizes = [8, 8], strides = [1, 1]} : vector<8x32xbf16> to vector<8x8xbf16>
    %c0_13 = arith.constant 0 : index
    %c0_14 = arith.constant 0 : index
    %c0_15 = arith.constant 0 : index
    %17 = vector.load %arg11[%c0_13, %c0_14, %c0_15] : memref<4x8x8xbf16, #tpu.memory_space<vmem>>, vector<1x8x8xbf16>
    %18 = vector.shape_cast %17 : vector<1x8x8xbf16> to vector<8x8xbf16>
    %19 = vector.shape_cast %16 : vector<8x8xbf16> to vector<1x8x8xbf16>
    tpu.vector_store %arg11[%c0_13, %c0_14, %c0_15], %19 {strides = array<i32>} : memref<4x8x8xbf16, #tpu.memory_space<vmem>>, vector<1x8x8xbf16>,
    %20 = vector.extract_strided_slice %11 {offsets = [0, 0], sizes = [8, 8], strides = [1, 1]} : vector<8x32xbf16> to vector<8x8xbf16>
    %c0_16 = arith.constant 0 : index
    %c0_17 = arith.constant 0 : index
    %c0_18 = arith.constant 0 : index
    %21 = vector.load %arg12[%c0_16, %c0_17, %c0_18] : memref<4x8x8xbf16, #tpu.memory_space<vmem>>, vector<1x8x8xbf16>
    %22 = vector.shape_cast %21 : vector<1x8x8xbf16> to vector<8x8xbf16>
    %23 = vector.shape_cast %20 : vector<8x8xbf16> to vector<1x8x8xbf16>
    tpu.vector_store %arg12[%c0_16, %c0_17, %c0_18], %23 {strides = array<i32>} : memref<4x8x8xbf16, #tpu.memory_space<vmem>>, vector<1x8x8xbf16>,
    %24 = vector.extract_strided_slice %5 {offsets = [0, 8], sizes = [8, 8], strides = [1, 1]} : vector<8x32xbf16> to vector<8x8xbf16>
    %c1 = arith.constant 1 : index
    %c0_19 = arith.constant 0 : index
    %c0_20 = arith.constant 0 : index
    %25 = vector.load %arg10[%c1, %c0_19, %c0_20] : memref<4x8x8xbf16, #tpu.memory_space<vmem>>, vector<1x8x8xbf16>
    %26 = vector.shape_cast %25 : vector<1x8x8xbf16> to vector<8x8xbf16>
    %27 = vector.shape_cast %24 : vector<8x8xbf16> to vector<1x8x8xbf16>
    tpu.vector_store %arg10[%c1, %c0_19, %c0_20], %27 {strides = array<i32>} : memref<4x8x8xbf16, #tpu.memory_space<vmem>>, vector<1x8x8xbf16>,
    %28 = vector.extract_strided_slice %8 {offsets = [0, 8], sizes = [8, 8], strides = [1, 1]} : vector<8x32xbf16> to vector<8x8xbf16>
    %c1_21 = arith.constant 1 : index
    %c0_22 = arith.constant 0 : index
    %c0_23 = arith.constant 0 : index
    %29 = vector.load %arg11[%c1_21, %c0_22, %c0_23] : memref<4x8x8xbf16, #tpu.memory_space<vmem>>, vector<1x8x8xbf16>
    %30 = vector.shape_cast %29 : vector<1x8x8xbf16> to vector<8x8xbf16>
    %31 = vector.shape_cast %28 : vector<8x8xbf16> to vector<1x8x8xbf16>
    tpu.vector_store %arg11[%c1_21, %c0_22, %c0_23], %31 {strides = array<i32>} : memref<4x8x8xbf16, #tpu.memory_space<vmem>>, vector<1x8x8xbf16>,
    %32 = vector.extract_strided_slice %11 {offsets = [0, 8], sizes = [8, 8], strides = [1, 1]} : vector<8x32xbf16> to vector<8x8xbf16>
    %c1_24 = arith.constant 1 : index
    %c0_25 = arith.constant 0 : index
    %c0_26 = arith.constant 0 : index
    %33 = vector.load %arg12[%c1_24, %c0_25, %c0_26] : memref<4x8x8xbf16, #tpu.memory_space<vmem>>, vector<1x8x8xbf16>
    %34 = vector.shape_cast %33 : vector<1x8x8xbf16> to vector<8x8xbf16>
    %35 = vector.shape_cast %32 : vector<8x8xbf16> to vector<1x8x8xbf16>
    tpu.vector_store %arg12[%c1_24, %c0_25, %c0_26], %35 {strides = array<i32>} : memref<4x8x8xbf16, #tpu.memory_space<vmem>>, vector<1x8x8xbf16>,
    %36 = vector.extract_strided_slice %5 {offsets = [0, 16], sizes = [8, 8], strides = [1, 1]} : vector<8x32xbf16> to vector<8x8xbf16>
    %c2 = arith.constant 2 : index
    %c0_27 = arith.constant 0 : index
    %c0_28 = arith.constant 0 : index
    %37 = vector.load %arg10[%c2, %c0_27, %c0_28] : memref<4x8x8xbf16, #tpu.memory_space<vmem>>, vector<1x8x8xbf16>
    %38 = vector.shape_cast %37 : vector<1x8x8xbf16> to vector<8x8xbf16>
    %39 = vector.shape_cast %36 : vector<8x8xbf16> to vector<1x8x8xbf16>
    tpu.vector_store %arg10[%c2, %c0_27, %c0_28], %39 {strides = array<i32>} : memref<4x8x8xbf16, #tpu.memory_space<vmem>>, vector<1x8x8xbf16>,
    %40 = vector.extract_strided_slice %8 {offsets = [0, 16], sizes = [8, 8], strides = [1, 1]} : vector<8x32xbf16> to vector<8x8xbf16>
    %c2_29 = arith.constant 2 : index
    %c0_30 = arith.constant 0 : index
    %c0_31 = arith.constant 0 : index
    %41 = vector.load %arg11[%c2_29, %c0_30, %c0_31] : memref<4x8x8xbf16, #tpu.memory_space<vmem>>, vector<1x8x8xbf16>
    %42 = vector.shape_cast %41 : vector<1x8x8xbf16> to vector<8x8xbf16>
    %43 = vector.shape_cast %40 : vector<8x8xbf16> to vector<1x8x8xbf16>
    tpu.vector_store %arg11[%c2_29, %c0_30, %c0_31], %43 {strides = array<i32>} : memref<4x8x8xbf16, #tpu.memory_space<vmem>>, vector<1x8x8xbf16>,
    %44 = vector.extract_strided_slice %11 {offsets = [0, 16], sizes = [8, 8], strides = [1, 1]} : vector<8x32xbf16> to vector<8x8xbf16>
    %c2_32 = arith.constant 2 : index
    %c0_33 = arith.constant 0 : index
    %c0_34 = arith.constant 0 : index
    %45 = vector.load %arg12[%c2_32, %c0_33, %c0_34] : memref<4x8x8xbf16, #tpu.memory_space<vmem>>, vector<1x8x8xbf16>
    %46 = vector.shape_cast %45 : vector<1x8x8xbf16> to vector<8x8xbf16>
    %47 = vector.shape_cast %44 : vector<8x8xbf16> to vector<1x8x8xbf16>
    tpu.vector_store %arg12[%c2_32, %c0_33, %c0_34], %47 {strides = array<i32>} : memref<4x8x8xbf16, #tpu.memory_space<vmem>>, vector<1x8x8xbf16>,
    %48 = vector.extract_strided_slice %5 {offsets = [0, 24], sizes = [8, 8], strides = [1, 1]} : vector<8x32xbf16> to vector<8x8xbf16>
    %c3 = arith.constant 3 : index
    %c0_35 = arith.constant 0 : index
    %c0_36 = arith.constant 0 : index
    %49 = vector.load %arg10[%c3, %c0_35, %c0_36] : memref<4x8x8xbf16, #tpu.memory_space<vmem>>, vector<1x8x8xbf16>
    %50 = vector.shape_cast %49 : vector<1x8x8xbf16> to vector<8x8xbf16>
    %51 = vector.shape_cast %48 : vector<8x8xbf16> to vector<1x8x8xbf16>
    tpu.vector_store %arg10[%c3, %c0_35, %c0_36], %51 {strides = array<i32>} : memref<4x8x8xbf16, #tpu.memory_space<vmem>>, vector<1x8x8xbf16>,
    %52 = vector.extract_strided_slice %8 {offsets = [0, 24], sizes = [8, 8], strides = [1, 1]} : vector<8x32xbf16> to vector<8x8xbf16>
    %c3_37 = arith.constant 3 : index
    %c0_38 = arith.constant 0 : index
    %c0_39 = arith.constant 0 : index
    %53 = vector.load %arg11[%c3_37, %c0_38, %c0_39] : memref<4x8x8xbf16, #tpu.memory_space<vmem>>, vector<1x8x8xbf16>
    %54 = vector.shape_cast %53 : vector<1x8x8xbf16> to vector<8x8xbf16>
    %55 = vector.shape_cast %52 : vector<8x8xbf16> to vector<1x8x8xbf16>
    tpu.vector_store %arg11[%c3_37, %c0_38, %c0_39], %55 {strides = array<i32>} : memref<4x8x8xbf16, #tpu.memory_space<vmem>>, vector<1x8x8xbf16>,
    %56 = vector.extract_strided_slice %11 {offsets = [0, 24], sizes = [8, 8], strides = [1, 1]} : vector<8x32xbf16> to vector<8x8xbf16>
    %c3_40 = arith.constant 3 : index
    %c0_41 = arith.constant 0 : index
    %c0_42 = arith.constant 0 : index
    %57 = vector.load %arg12[%c3_40, %c0_41, %c0_42] : memref<4x8x8xbf16, #tpu.memory_space<vmem>>, vector<1x8x8xbf16>
    %58 = vector.shape_cast %57 : vector<1x8x8xbf16> to vector<8x8xbf16>
    %59 = vector.shape_cast %56 : vector<8x8xbf16> to vector<1x8x8xbf16>
    tpu.vector_store %arg12[%c3_40, %c0_41, %c0_42], %59 {strides = array<i32>} : memref<4x8x8xbf16, #tpu.memory_space<vmem>>, vector<1x8x8xbf16>,
    %60 = tpu.iota {dimensions = array<i32: 0>} : vector<8x1xi32>
    %61 = tpu.iota {dimensions = array<i32: 1>} : vector<1x8xi32>
    %62 = vector.broadcast %60 : vector<8x1xi32> to vector<8x8xi32>
    %63 = vector.broadcast %61 : vector<1x8xi32> to vector<8x8xi32>
    %64 = arith.cmpi sge, %62, %63 : vector<8x8xi32>
    %cst_43 = arith.constant 0.000000e+00 : f32
    %cst_44 = arith.constant -1.000000e+20 : f32
    %65 = vector.broadcast %cst_43 : f32 to vector<8x8xf32>
    %66 = vector.broadcast %cst_44 : f32 to vector<8x8xf32>
    %67 = arith.select %64, %65, %66 : vector<8x8xi1>, vector<8x8xf32>
    %c0_i32 = arith.constant 0 : i32
    %c4_i32 = arith.constant 4 : i32
    %68 = arith.addi %c0_i32, %c4_i32 : i32
    %c1_i32 = arith.constant 1 : i32
    scf.for %arg15 = %c0_i32 to %68 step %c1_i32  : i32 {
      %115 = arith.index_cast %arg15 : i32 to index
      %c0_82 = arith.constant 0 : index
      %c0_83 = arith.constant 0 : index
      %116 = vector.load %arg10[%115, %c0_82, %c0_83] : memref<4x8x8xbf16, #tpu.memory_space<vmem>>, vector<1x8x8xbf16>
      %117 = vector.shape_cast %116 : vector<1x8x8xbf16> to vector<8x8xbf16>
      %118 = arith.index_cast %arg15 : i32 to index
      %c0_84 = arith.constant 0 : index
      %c0_85 = arith.constant 0 : index
      %119 = vector.load %arg11[%118, %c0_84, %c0_85] : memref<4x8x8xbf16, #tpu.memory_space<vmem>>, vector<1x8x8xbf16>
      %120 = vector.shape_cast %119 : vector<1x8x8xbf16> to vector<8x8xbf16>
      %121 = arith.index_cast %arg15 : i32 to index
      %c0_86 = arith.constant 0 : index
      %c0_87 = arith.constant 0 : index
      %122 = vector.load %arg12[%121, %c0_86, %c0_87] : memref<4x8x8xbf16, #tpu.memory_space<vmem>>, vector<1x8x8xbf16>
      %123 = vector.shape_cast %122 : vector<1x8x8xbf16> to vector<8x8xbf16>
      %cst_88 = arith.constant dense<0.000000e+00> : vector<8x8xf32>
      %124 = tpu.matmul %117, %120, %cst_88 {dimension_numbers = #tpu.dot_dimension_numbers<[1], [1], [0], [0], [0, 0, 1, 0], [], []>} : vector<8x8xbf16>, vector<8x8xbf16>, vector<8x8xf32> -> vector<8x8xf32>
      %125 = arith.addf %124, %67 : vector<8x8xf32>
      %cst_89 = arith.constant dense<0xFF800000> : vector<8xf32>
      %126 = vector.multi_reduction <maximumf>, %125, %cst_89 [1] : vector<8x8xf32> to vector<8xf32>
      %127 = vector.shape_cast %126 : vector<8xf32> to vector<8x1xf32>
      %128 = vector.broadcast %127 : vector<8x1xf32> to vector<8x8xf32>
      %129 = arith.subf %125, %128 : vector<8x8xf32>
      %130 = math.exp %129 : vector<8x8xf32>
      %cst_90 = arith.constant dense<0.000000e+00> : vector<8xf32>
      %131 = vector.multi_reduction <add>, %130, %cst_90 [1] : vector<8x8xf32> to vector<8xf32>
      %132 = vector.shape_cast %131 : vector<8xf32> to vector<8x1xf32>
      %133 = tpu.reciprocal %132 {approx = true} : vector<8x1xf32> -> vector<8x1xf32>
      %134 = vector.broadcast %133 : vector<8x1xf32> to vector<8x8xf32>
      %135 = arith.mulf %130, %134 : vector<8x8xf32>
      %136 = arith.truncf %135 : vector<8x8xf32> to vector<8x8xbf16>
      %cst_91 = arith.constant dense<0.000000e+00> : vector<8x8xf32>
      %137 = tpu.matmul %136, %123, %cst_91 {dimension_numbers = #tpu.dot_dimension_numbers<[1], [0], [0], [1], [0, 0, 1, 1], [], []>} : vector<8x8xbf16>, vector<8x8xbf16>, vector<8x8xf32> -> vector<8x8xf32>
      %138 = arith.truncf %137 : vector<8x8xf32> to vector<8x8xbf16>
      %139 = arith.index_cast %arg15 : i32 to index
      %c0_92 = arith.constant 0 : index
      %c0_93 = arith.constant 0 : index
      %140 = vector.load %arg13[%139, %c0_92, %c0_93] : memref<4x8x8xbf16, #tpu.memory_space<vmem>>, vector<1x8x8xbf16>
      %141 = vector.shape_cast %140 : vector<1x8x8xbf16> to vector<8x8xbf16>
      %142 = vector.shape_cast %138 : vector<8x8xbf16> to vector<1x8x8xbf16>
      tpu.vector_store %arg13[%139, %c0_92, %c0_93], %142 {strides = array<i32>} : memref<4x8x8xbf16, #tpu.memory_space<vmem>>, vector<1x8x8xbf16>,
    }
    %c4_i32_45 = arith.constant 4 : i32
    %c0_46 = arith.constant 0 : index
    %c0_47 = arith.constant 0 : index
    %c0_48 = arith.constant 0 : index
    %69 = vector.load %arg13[%c0_46, %c0_47, %c0_48] : memref<4x8x8xbf16, #tpu.memory_space<vmem>>, vector<1x8x8xbf16>
    %70 = vector.shape_cast %69 : vector<1x8x8xbf16> to vector<8x8xbf16>
    %c0_49 = arith.constant 0 : index
    %c0_50 = arith.constant 0 : index
    %71 = vector.load %arg14[%c0_49, %c0_50] : memref<8x32xbf16, #tpu.memory_space<vmem>>, vector<8x8xbf16>
    tpu.vector_store %arg14[%c0_49, %c0_50], %70 {strides = array<i32>} : memref<8x32xbf16, #tpu.memory_space<vmem>>, vector<8x8xbf16>,
    %c1_51 = arith.constant 1 : index
    %c0_52 = arith.constant 0 : index
    %c0_53 = arith.constant 0 : index
    %72 = vector.load %arg13[%c1_51, %c0_52, %c0_53] : memref<4x8x8xbf16, #tpu.memory_space<vmem>>, vector<1x8x8xbf16>
    %73 = vector.shape_cast %72 : vector<1x8x8xbf16> to vector<8x8xbf16>
    %c0_54 = arith.constant 0 : index
    %c8 = arith.constant 8 : index
    %74 = vector.load %arg14[%c0_54, %c8] : memref<8x32xbf16, #tpu.memory_space<vmem>>, vector<8x8xbf16>
    tpu.vector_store %arg14[%c0_54, %c8], %73 {strides = array<i32>} : memref<8x32xbf16, #tpu.memory_space<vmem>>, vector<8x8xbf16>,
    %c2_55 = arith.constant 2 : index
    %c0_56 = arith.constant 0 : index
    %c0_57 = arith.constant 0 : index
    %75 = vector.load %arg13[%c2_55, %c0_56, %c0_57] : memref<4x8x8xbf16, #tpu.memory_space<vmem>>, vector<1x8x8xbf16>
    %76 = vector.shape_cast %75 : vector<1x8x8xbf16> to vector<8x8xbf16>
    %c0_58 = arith.constant 0 : index
    %c16 = arith.constant 16 : index
    %77 = vector.load %arg14[%c0_58, %c16] : memref<8x32xbf16, #tpu.memory_space<vmem>>, vector<8x8xbf16>
    tpu.vector_store %arg14[%c0_58, %c16], %76 {strides = array<i32>} : memref<8x32xbf16, #tpu.memory_space<vmem>>, vector<8x8xbf16>,
    %c3_59 = arith.constant 3 : index
    %c0_60 = arith.constant 0 : index
    %c0_61 = arith.constant 0 : index
    %78 = vector.load %arg13[%c3_59, %c0_60, %c0_61] : memref<4x8x8xbf16, #tpu.memory_space<vmem>>, vector<1x8x8xbf16>
    %79 = vector.shape_cast %78 : vector<1x8x8xbf16> to vector<8x8xbf16>
    %c0_62 = arith.constant 0 : index
    %c24 = arith.constant 24 : index
    %80 = vector.load %arg14[%c0_62, %c24] : memref<8x32xbf16, #tpu.memory_space<vmem>>, vector<8x8xbf16>
    tpu.vector_store %arg14[%c0_62, %c24], %79 {strides = array<i32>} : memref<8x32xbf16, #tpu.memory_space<vmem>>, vector<8x8xbf16>,
    %c0_63 = arith.constant 0 : index
    %c0_64 = arith.constant 0 : index
    %81 = vector.load %arg14[%c0_63, %c0_64] : memref<8x32xbf16, #tpu.memory_space<vmem>>, vector<8x32xbf16>
    %c0_65 = arith.constant 0 : index
    %c0_66 = arith.constant 0 : index
    %82 = vector.load %arg5[%c0_65, %c0_66] : memref<32x32xbf16, #tpu.memory_space<vmem>>, vector<32x32xbf16>
    %cst_67 = arith.constant dense<0.000000e+00> : vector<8x32xf32>
    %83 = tpu.matmul %81, %82, %cst_67 {dimension_numbers = #tpu.dot_dimension_numbers<[1], [0], [0], [1], [0, 0, 1, 1], [], []>} : vector<8x32xbf16>, vector<32x32xbf16>, vector<8x32xf32> -> vector<8x32xf32>
    %c0_68 = arith.constant 0 : index
    %c0_69 = arith.constant 0 : index
    %84 = vector.load %arg6[%c0_68, %c0_69] : memref<1x32xf32, #tpu.memory_space<vmem>>, vector<1x32xf32>
    %85 = vector.broadcast %84 : vector<1x32xf32> to vector<8x32xf32>
    %86 = arith.addf %83, %85 : vector<8x32xf32>
    %87 = arith.addf %86, %1 : vector<8x32xf32>
    %cst_70 = arith.constant dense<0.000000e+00> : vector<8xf32>
    %88 = vector.multi_reduction <add>, %87, %cst_70 [1] : vector<8x32xf32> to vector<8xf32>
    %89 = vector.shape_cast %88 : vector<8xf32> to vector<8x1xf32>
    %cst_71 = arith.constant 3.200000e+01 : f32
    %90 = vector.broadcast %cst_71 : f32 to vector<8x1xf32>
    %91 = arith.divf %89, %90 : vector<8x1xf32>
    %92 = vector.broadcast %91 : vector<8x1xf32> to vector<8x32xf32>
    %93 = arith.subf %87, %92 : vector<8x32xf32>
    %94 = arith.mulf %93, %93 : vector<8x32xf32>
    %cst_72 = arith.constant dense<0.000000e+00> : vector<8xf32>
    %95 = vector.multi_reduction <add>, %94, %cst_72 [1] : vector<8x32xf32> to vector<8xf32>
    %96 = vector.shape_cast %95 : vector<8xf32> to vector<8x1xf32>
    %cst_73 = arith.constant 3.200000e+01 : f32
    %97 = vector.broadcast %cst_73 : f32 to vector<8x1xf32>
    %98 = arith.divf %96, %97 : vector<8x1xf32>
    %99 = vector.broadcast %91 : vector<8x1xf32> to vector<8x32xf32>
    %100 = arith.subf %87, %99 : vector<8x32xf32>
    %cst_74 = arith.constant 9.99999974E-6 : f32
    %101 = vector.broadcast %cst_74 : f32 to vector<8x1xf32>
    %102 = arith.addf %98, %101 : vector<8x1xf32>
    %103 = math.rsqrt %102 : vector<8x1xf32>
    %104 = vector.broadcast %103 : vector<8x1xf32> to vector<8x32xf32>
    %105 = arith.mulf %100, %104 : vector<8x32xf32>
    %c0_75 = arith.constant 0 : index
    %c0_76 = arith.constant 0 : index
    %106 = vector.load %arg7[%c0_75, %c0_76] : memref<1x32xf32, #tpu.memory_space<vmem>>, vector<1x32xf32>
    %107 = vector.broadcast %106 : vector<1x32xf32> to vector<8x32xf32>
    %108 = arith.mulf %105, %107 : vector<8x32xf32>
    %c0_77 = arith.constant 0 : index
    %c0_78 = arith.constant 0 : index
    %109 = vector.load %arg8[%c0_77, %c0_78] : memref<1x32xf32, #tpu.memory_space<vmem>>, vector<1x32xf32>
    %110 = vector.broadcast %109 : vector<1x32xf32> to vector<8x32xf32>
    %111 = arith.addf %108, %110 : vector<8x32xf32>
    %c0_79 = arith.constant 0 : index
    %c0_80 = arith.constant 0 : index
    %c0_81 = arith.constant 0 : index
    %112 = vector.load %arg9[%c0_79, %c0_80, %c0_81] : memref<1x8x32xf32, #tpu.memory_space<vmem>>, vector<1x8x32xf32>
    %113 = vector.shape_cast %112 : vector<1x8x32xf32> to vector<8x32xf32>
    %114 = vector.shape_cast %111 : vector<8x32xf32> to vector<1x8x32xf32>
    tpu.vector_store %arg9[%c0_79, %c0_80, %c0_81], %114 {strides = array<i32>} : memref<1x8x32xf32, #tpu.memory_space<vmem>>, vector<1x8x32xf32>,
    return
  }
  func.func @transform_0(%arg0: i32) -> (i32, i32, i32) {
    %c0_i32 = arith.constant 0 : i32
    %c0_i32_0 = arith.constant 0 : i32
    %c0_i32_1 = arith.constant 0 : i32
    return %arg0, %c0_i32, %c0_i32_0 : i32, i32, i32
  }
  func.func @transform_1(%arg0: i32) -> (i32, i32) {
    %c0_i32 = arith.constant 0 : i32
    %c0_i32_0 = arith.constant 0 : i32
    %c0_i32_1 = arith.constant 0 : i32
    return %c0_i32, %c0_i32_0 : i32, i32
  }
  func.func @transform_2(%arg0: i32) -> (i32, i32) {
    %c0_i32 = arith.constant 0 : i32
    %c0_i32_0 = arith.constant 0 : i32
    %c0_i32_1 = arith.constant 0 : i32
    return %c0_i32, %c0_i32_0 : i32, i32
  }
  func.func @transform_3(%arg0: i32) -> (i32, i32) {
    %c0_i32 = arith.constant 0 : i32
    %c0_i32_0 = arith.constant 0 : i32
    %c0_i32_1 = arith.constant 0 : i32
    return %c0_i32, %c0_i32_0 : i32, i32
  }
  func.func @transform_4(%arg0: i32) -> (i32, i32) {
    %c0_i32 = arith.constant 0 : i32
    %c0_i32_0 = arith.constant 0 : i32
    %c0_i32_1 = arith.constant 0 : i32
    return %c0_i32, %c0_i32_0 : i32, i32
  }
  func.func @transform_5(%arg0: i32) -> (i32, i32) {
    %c0_i32 = arith.constant 0 : i32
    %c0_i32_0 = arith.constant 0 : i32
    %c0_i32_1 = arith.constant 0 : i32
    return %c0_i32, %c0_i32_0 : i32, i32
  }
  func.func @transform_6(%arg0: i32) -> (i32, i32) {
    %c0_i32 = arith.constant 0 : i32
    %c0_i32_0 = arith.constant 0 : i32
    %c0_i32_1 = arith.constant 0 : i32
    return %c0_i32, %c0_i32_0 : i32, i32
  }
  func.func @transform_7(%arg0: i32) -> (i32, i32) {
    %c0_i32 = arith.constant 0 : i32
    %c0_i32_0 = arith.constant 0 : i32
    %c0_i32_1 = arith.constant 0 : i32
    return %c0_i32, %c0_i32_0 : i32, i32
  }
  func.func @transform_8(%arg0: i32) -> (i32, i32, i32) {
    %c0_i32 = arith.constant 0 : i32
    %c0_i32_0 = arith.constant 0 : i32
    %c0_i32_1 = arith.constant 0 : i32
    return %arg0, %c0_i32, %c0_i32_0 : i32, i32, i32
  }
}

</mosaic_0001>

<llo_original>
// kernel: gpt2_forward.6
$region0: #{gpt2_forward.6}
  #allocation0 [shape = 'u32[]', space=smem, size = 0x4, offset = 0x4, fixed_abs, tag = 'smem constant byte address 0x4 - core index']
  #allocation1 [shape = 'u32[144,128]{1,0:T(1,128)}', space=vmem, size = 0x12000, scoped, tag = 'internal scratch']
  #allocation2 [shape = 'f32[16,32]{1,0:T(8,128)}', space=vmem, size = 0x2000, scoped, tag = 'scratch operand']
  %s0 = inlined_call_operand.vmem [shape: f32[16,32], index: 0, kind: input, shape index: {}]
  %s1 = inlined_call_operand.vmem [shape: bf16[32,128], index: 1, kind: input, shape index: {}]
  %s2 = inlined_call_operand.vmem [shape: f32[1,128], index: 2, kind: input, shape index: {}]
  %s3 = inlined_call_operand.vmem [shape: bf16[128,32], index: 3, kind: input, shape index: {}]
  %s4 = inlined_call_operand.vmem [shape: f32[1,32], index: 4, kind: input, shape index: {}]
  %s5 = inlined_call_operand.vmem [shape: f32[1,32], index: 5, kind: input, shape index: {}]
  %s6 = inlined_call_operand.vmem [shape: f32[1,32], index: 6, kind: input, shape index: {}]
  %s7 = inlined_call_operand.vmem [shape: f32[16,32], index: 7, kind: output, shape index: {}]
  %s8 = sld [smem:[#allocation0]]
  $region46: #{gpt2_forward.6} parent=0
    _
  %s10 = ssub.s32 1, %s8
  %s11 = scalar_select 0, %s10, %s8
  // Predicated region
  $region2: #{gpt2_forward.6} parent=0 // pred_check
    _
  $region3: #{gpt2_forward.6} parent=0 // pred_check_branch
    %13 = sbr.rel (0) target = $region5
  $region4: #{gpt2_forward.6} parent=0 // pred_region
    _
  $region5: #{gpt2_forward.6} parent=0 // pred_fallthru
    _
  // Predicated region
  $region6: #{gpt2_forward.6} parent=0 // pred_check
    _
  $region7: #{gpt2_forward.6} parent=0 // pred_check_branch
    %15 = sbr.rel (0) target = $region9
  $region8: #{gpt2_forward.6} parent=0 // pred_region
    _
  $region9: #{gpt2_forward.6} parent=0 // pred_fallthru
    _
  // Predicated region
  $region10: #{gpt2_forward.6} parent=0 // pred_check
    _
  $region11: #{gpt2_forward.6} parent=0 // pred_check_branch
    %17 = sbr.rel (0) target = $region13
  $region12: #{gpt2_forward.6} parent=0 // pred_region
    _
  $region13: #{gpt2_forward.6} parent=0 // pred_fallthru
    _
  // Predicated region
  $region14: #{gpt2_forward.6} parent=0 // pred_check
    _
  $region15: #{gpt2_forward.6} parent=0 // pred_check_branch
    %19 = sbr.rel (0) target = $region17
  $region16: #{gpt2_forward.6} parent=0 // pred_region
    _
  $region17: #{gpt2_forward.6} parent=0 // pred_fallthru
    _
  // Predicated region
  $region18: #{gpt2_forward.6} parent=0 // pred_check
    _
  $region19: #{gpt2_forward.6} parent=0 // pred_check_branch
    %21 = sbr.rel (0) target = $region21
  $region20: #{gpt2_forward.6} parent=0 // pred_region
    _
  $region21: #{gpt2_forward.6} parent=0 // pred_fallthru
    _
  // Predicated region
  $region22: #{gpt2_forward.6} parent=0 // pred_check
    _
  $region23: #{gpt2_forward.6} parent=0 // pred_check_branch
    %23 = sbr.rel (0) target = $region25
  $region24: #{gpt2_forward.6} parent=0 // pred_region
    _
  $region25: #{gpt2_forward.6} parent=0 // pred_fallthru
    _
  // Predicated region
  $region26: #{gpt2_forward.6} parent=0 // pred_check
    _
  $region27: #{gpt2_forward.6} parent=0 // pred_check_branch
    %25 = sbr.rel (0) target = $region29
  $region28: #{gpt2_forward.6} parent=0 // pred_region
    _
  $region29: #{gpt2_forward.6} parent=0 // pred_fallthru
    _
  %p27 = scmp.eq.s32.totalorder 0, 0
  // Predicated region
  $region30: #{gpt2_forward.6} parent=0 // pred_check
    %p28 = pneg %p27
  $region31: #{gpt2_forward.6} parent=0 // pred_check_branch
    %30 = sbr.rel (%p28) target = $region33
  $region32: #{gpt2_forward.6} parent=0 // pred_region
    %vm31 = vcmask 261120
    %32 = vst.msk [vmem:[#allocation2] sm:$0xff] %vm31, 0.0
    %33 = vst.msk [vmem:[#allocation2 + $0x8] sm:$0xff] %vm31, 0.0
  $region33: #{gpt2_forward.6} parent=0 // pred_fallthru
    _
  %v34 = vld [vmem:[%s0] sm:$0xff]
  %v35 = vld [vmem:[%s0 + $0x8] sm:$0xff]
  %v36 = vpack.c.bf16 %v35, %v34
  %v37 = vld [vmem:[%s1] sm:$0xf]
  %v38 = vld [vmem:[%s1 + $0x4] sm:$0xf]
  %v39 = vld [vmem:[%s1 + $0x8] sm:$0xf]
  %v40 = vld [vmem:[%s1 + $0xc] sm:$0xf]
  %v41 = vld [vmem:[%s2] sm:$0x1]
  %v43 = vlaneseq
  %v44 = vshrl.u32 %v43, 7
  %v45 = vsub.s32 0, %v44
  %v46 = vrot.slane %v41, %v45
  %v52 = vunpack.c.l.b16 %v37
  %v53 = vunpack.c.l.b16 %v38
  %v54 = vunpack.c.l.b16 %v39
  %v55 = vunpack.c.l.b16 %v40
  %v56 = vpack.c.b16 %v53, %v52
  %v57 = vpack.c.b16 %v55, %v54
  %vm60 = vcmask 261120
  %v62 = vsel %vm60, %v36, 0
  %64 = vmatprep.subr.bf16.mxu0 0
  %65 = vmatpush1.bf16.msra.mxu0 %v56
  %66 = vmatprep.subr.bf16.mxu0 0
  %67 = vmatpush1.bf16.msra.mxu0 %v57
  %68 = vmatprep.subr.bf16.mxu0 0
  %69 = vmatpush1.bf16.msra.mxu0 0
  %70 = vmatprep.subr.bf16.mxu0 0
  %71 = vmatpush1.bf16.msra.mxu0 0
  %72 = vmatprep.subr.bf16.mxu0 0
  %73 = vmatpush1.bf16.msra.mxu0 0
  %74 = vmatprep.subr.bf16.mxu0 0
  %75 = vmatpush1.bf16.msra.mxu0 0
  %76 = vmatprep.subr.bf16.mxu0 0
  %77 = vmatpush1.bf16.msra.mxu0 0
  %78 = vmatprep.subr.bf16.mxu0 0
  %79 = vmatpush1.bf16.msra.mxu0 0
  %80 = vmatprep.subr.bf16.mxu0 0
  %81 = vmatpush1.bf16.msra.mxu0 0
  %82 = vmatprep.subr.bf16.mxu0 0
  %83 = vmatpush1.bf16.msra.mxu0 0
  %84 = vmatprep.subr.bf16.mxu0 0
  %85 = vmatpush1.bf16.msra.mxu0 0
  %86 = vmatprep.subr.bf16.mxu0 0
  %87 = vmatpush1.bf16.msra.mxu0 0
  %88 = vmatprep.subr.bf16.mxu0 0
  %89 = vmatpush1.bf16.msra.mxu0 0
  %90 = vmatprep.subr.bf16.mxu0 0
  %91 = vmatpush1.bf16.msra.mxu0 0
  %92 = vmatprep.subr.bf16.mxu0 0
  %93 = vmatpush1.bf16.msra.mxu0 0
  %94 = vmatprep.subr.bf16.mxu0 0
  %95 = vmatpush1.bf16.msra.mxu0 0
  %96 = vmatprep.mubr.bf16.mxu0 0
  %97 = vmatmul.mubr.bf16.gmra.mrb[0].mxu0 %v62
  %v98 = vpop.f32.mrb[0].mxu0
  %v99 = vadd.f32 %v46, %v98
  %v100 = vpop.f32.mrb[0].mxu0
  %v101 = vpop.f32.mrb[0].mxu0
  %v102 = vadd.f32 %v46, %v101
  %v103 = vpop.f32.mrb[0].mxu0
  %104 = vdwg.mxu0
  %v105 = vmax.f32 %v99, 0.0
  %v106 = vmax.f32 %v102, 0.0
  %v107 = vld [vmem:[#allocation2] sm:$0xff]
  %v108 = vld [vmem:[#allocation2 + $0x8] sm:$0xff]
  %v109 = vpack.c.bf16 %v106, %v105
  %v110 = vld [vmem:[%s3] sm:$0xf]
  %v111 = vld [vmem:[%s3 + $0x4] sm:$0xf]
  %v112 = vld [vmem:[%s3 + $0x8] sm:$0xf]
  %v113 = vld [vmem:[%s3 + $0xc] sm:$0xf]
  %v114 = vld [vmem:[%s3 + $0x10] sm:$0xf]
  %v115 = vld [vmem:[%s3 + $0x14] sm:$0xf]
  %v116 = vld [vmem:[%s3 + $0x18] sm:$0xf]
  %v117 = vld [vmem:[%s3 + $0x1c] sm:$0xf]
  %v118 = vld [vmem:[%s3 + $0x20] sm:$0xf]
  %v119 = vld [vmem:[%s3 + $0x24] sm:$0xf]
  %v120 = vld [vmem:[%s3 + $0x28] sm:$0xf]
  %v121 = vld [vmem:[%s3 + $0x2c] sm:$0xf]
  %v122 = vld [vmem:[%s3 + $0x30] sm:$0xf]
  %v123 = vld [vmem:[%s3 + $0x34] sm:$0xf]
  %v124 = vld [vmem:[%s3 + $0x38] sm:$0xf]
  %v125 = vld [vmem:[%s3 + $0x3c] sm:$0xf]
  %v142 = vunpack.c.l.b16 %v110
  %v143 = vunpack.c.l.b16 %v111
  %v144 = vunpack.c.l.b16 %v112
  %v145 = vunpack.c.l.b16 %v113
  %v146 = vunpack.c.l.b16 %v114
  %v147 = vunpack.c.l.b16 %v115
  %v148 = vunpack.c.l.b16 %v116
  %v149 = vunpack.c.l.b16 %v117
  %v150 = vunpack.c.l.b16 %v118
  %v151 = vunpack.c.l.b16 %v119
  %v152 = vunpack.c.l.b16 %v120
  %v153 = vunpack.c.l.b16 %v121
  %v154 = vunpack.c.l.b16 %v122
  %v155 = vunpack.c.l.b16 %v123
  %v156 = vunpack.c.l.b16 %v124
  %v157 = vunpack.c.l.b16 %v125
  %v158 = vpack.c.b16 %v143, %v142
  %v159 = vpack.c.b16 %v145, %v144
  %v160 = vpack.c.b16 %v147, %v146
  %v161 = vpack.c.b16 %v149, %v148
  %v162 = vpack.c.b16 %v151, %v150
  %v163 = vpack.c.b16 %v153, %v152
  %v164 = vpack.c.b16 %v155, %v154
  %v165 = vpack.c.b16 %v157, %v156
  %174 = vmatprep.subr.bf16.mxu0 0
  %175 = vmatpush1.bf16.msra.mxu0 %v158
  %176 = vmatprep.subr.bf16.mxu0 0
  %177 = vmatpush1.bf16.msra.mxu0 %v159
  %178 = vmatprep.subr.bf16.mxu0 0
  %179 = vmatpush1.bf16.msra.mxu0 %v160
  %180 = vmatprep.subr.bf16.mxu0 0
  %181 = vmatpush1.bf16.msra.mxu0 %v161
  %182 = vmatprep.subr.bf16.mxu0 0
  %183 = vmatpush1.bf16.msra.mxu0 %v162
  %184 = vmatprep.subr.bf16.mxu0 0
  %185 = vmatpush1.bf16.msra.mxu0 %v163
  %186 = vmatprep.subr.bf16.mxu0 0
  %187 = vmatpush1.bf16.msra.mxu0 %v164
  %188 = vmatprep.subr.bf16.mxu0 0
  %189 = vmatpush1.bf16.msra.mxu0 %v165
  %190 = vmatprep.subr.bf16.mxu0 0
  %191 = vmatpush1.bf16.msra.mxu0 0
  %192 = vmatprep.subr.bf16.mxu0 0
  %193 = vmatpush1.bf16.msra.mxu0 0
  %194 = vmatprep.subr.bf16.mxu0 0
  %195 = vmatpush1.bf16.msra.mxu0 0
  %196 = vmatprep.subr.bf16.mxu0 0
  %197 = vmatpush1.bf16.msra.mxu0 0
  %198 = vmatprep.subr.bf16.mxu0 0
  %199 = vmatpush1.bf16.msra.mxu0 0
  %200 = vmatprep.subr.bf16.mxu0 0
  %201 = vmatpush1.bf16.msra.mxu0 0
  %202 = vmatprep.subr.bf16.mxu0 0
  %203 = vmatpush1.bf16.msra.mxu0 0
  %204 = vmatprep.subr.bf16.mxu0 0
  %205 = vmatpush1.bf16.msra.mxu0 0
  %206 = vmatprep.mubr.bf16.mxu0 0
  %207 = vmatmul.mubr.bf16.gmra.mrb[0].mxu0 %v109
  %v208 = vpop.f32.mrb[0].mxu0
  %v209 = vadd.f32 0.0, %v208
  %v210 = vpop.f32.mrb[0].mxu0
  %v211 = vpop.f32.mrb[0].mxu0
  %v212 = vadd.f32 0.0, %v211
  %v213 = vpop.f32.mrb[0].mxu0
  %214 = vdwg.mxu0
  %v215 = vadd.f32 %v107, %v209
  %v216 = vadd.f32 %v108, %v212
  %217 = vst.msk [vmem:[#allocation2] sm:$0xff] %vm60, %v215
  %218 = vst.msk [vmem:[#allocation2 + $0x8] sm:$0xff] %vm60, %v216
  // Predicated region
  $region34: #{gpt2_forward.6} parent=0 // pred_check
    %p219 = pneg %p27
  $region35: #{gpt2_forward.6} parent=0 // pred_check_branch
    %221 = sbr.rel (%p219) target = $region37
  $region36: #{gpt2_forward.6} parent=0 // pred_region
    %v222 = vld [vmem:[#allocation2] sm:$0xff]
    %v223 = vld [vmem:[#allocation2 + $0x8] sm:$0xff]
    %v224 = vld [vmem:[%s6] sm:$0x1]
    %v226 = vlaneseq
    %v227 = vshrl.u32 %v226, 7
    %v228 = vsub.s32 0, %v227
    %v229 = vrot.slane %v224, %v228
    %v231 = vadd.f32 %v222, %v229
    %v232 = vadd.f32 %v223, %v229
    %v233 = vadd.f32 %v231, %v34
    %v234 = vadd.f32 %v232, %v35
    %v235 = vsel %vm60, %v233, 0.0
    %236 = vadd.xlane.f32.xlu0 %v235
    %v237 = vpop.xlane.xlu0 %236
    %v238 = vsel %vm60, %v234, 0.0
    %239 = vadd.xlane.f32.xlu0 %v238
    %v240 = vpop.xlane.xlu0 %239
    %v241 = vrcp.pop 32.0
    %v242 = vmul.f32 %v237, %v241
    %v243 = vmul.f32 %v240, %v241
    %v244 = vsub.f32 %v233, %v242
    %v245 = vsub.f32 %v234, %v243
    %v246 = vmul.f32 %v244, %v244
    %v247 = vmul.f32 %v245, %v245
    %v248 = vsel %vm60, %v246, 0.0
    %249 = vadd.xlane.f32.xlu0 %v248
    %v250 = vpop.xlane.xlu0 %249
    %v251 = vsel %vm60, %v247, 0.0
    %252 = vadd.xlane.f32.xlu0 %v251
    %v253 = vpop.xlane.xlu0 %252
    %v254 = vmul.f32 %v250, %v241
    %v255 = vmul.f32 %v253, %v241
    %v256 = vadd.f32 %v254, 1e-05
    %v257 = vadd.f32 %v255, 1e-05
    %v258 = vrsqrt.pop %v256
    %v259 = vrsqrt.pop %v257
    %v260 = vmul.f32 %v244, %v258
    %v261 = vmul.f32 %v245, %v259
    %v262 = vld [vmem:[%s4] sm:$0x1]
    %v264 = vlaneseq
    %v265 = vshrl.u32 %v264, 7
    %v266 = vsub.s32 0, %v265
    %v267 = vrot.slane %v262, %v266
    %v269 = vmul.f32 %v260, %v267
    %v270 = vmul.f32 %v261, %v267
    %v271 = vld [vmem:[%s5] sm:$0x1]
    %v273 = vlaneseq
    %v274 = vshrl.u32 %v273, 7
    %v275 = vsub.s32 0, %v274
    %v276 = vrot.slane %v271, %v275
    %v278 = vadd.f32 %v269, %v276
    %v279 = vadd.f32 %v270, %v276
    %280 = vst.msk [vmem:[%s7] sm:$0xff] %vm60, %v278
    %281 = vst.msk [vmem:[%s7 + $0x8] sm:$0xff] %vm60, %v279
  $region37: #{gpt2_forward.6} parent=0 // pred_fallthru
    _
  // Predicated region
  $region38: #{gpt2_forward.6} parent=0 // pred_check
    _
  $region39: #{gpt2_forward.6} parent=0 // pred_check_branch
    %283 = sbr.rel (0) target = $region41
  $region40: #{gpt2_forward.6} parent=0 // pred_region
    _
  $region41: #{gpt2_forward.6} parent=0 // pred_fallthru
    _
  // Predicated region
  $region42: #{gpt2_forward.6} parent=0 // pred_check
    _
  $region43: #{gpt2_forward.6} parent=0 // pred_check_branch
    %285 = sbr.rel (0) target = $region45
  $region44: #{gpt2_forward.6} parent=0 // pred_region
    _
  $region45: #{gpt2_forward.6} parent=0 // pred_fallthru
    _

// kernel: gpt2_forward.9
$region0: #{gpt2_forward.9}
  #allocation0 [shape = 'u32[]', space=smem, size = 0x4, offset = 0x4, fixed_abs, tag = 'smem constant byte address 0x4 - core index']
  #allocation1 [shape = 'u32[144,128]{1,0:T(1,128)}', space=vmem, size = 0x12000, scoped, tag = 'internal scratch']
  %s0 = inlined_call_operand.vmem [shape: f32[16,32], index: 0, kind: input, shape index: {}]
  %s1 = inlined_call_operand.vmem [shape: bf16[32,128], index: 1, kind: input, shape index: {}]
  %s2 = inlined_call_operand.vmem [shape: f32[1,128], index: 2, kind: input, shape index: {}]
  %s3 = inlined_call_operand.vmem [shape: bf16[16,128], index: 3, kind: output, shape index: {}]
  %s4 = sld [smem:[#allocation0]]
  $region22: #{gpt2_forward.9} parent=0
    _
  %s6 = ssub.s32 1, %s4
  %s7 = scalar_select 0, %s6, %s4
  // Predicated region
  $region2: #{gpt2_forward.9} parent=0 // pred_check
    _
  $region3: #{gpt2_forward.9} parent=0 // pred_check_branch
    %9 = sbr.rel (0) target = $region5
  $region4: #{gpt2_forward.9} parent=0 // pred_region
    _
  $region5: #{gpt2_forward.9} parent=0 // pred_fallthru
    _
  // Predicated region
  $region6: #{gpt2_forward.9} parent=0 // pred_check
    _
  $region7: #{gpt2_forward.9} parent=0 // pred_check_branch
    %11 = sbr.rel (0) target = $region9
  $region8: #{gpt2_forward.9} parent=0 // pred_region
    _
  $region9: #{gpt2_forward.9} parent=0 // pred_fallthru
    _
  // Predicated region
  $region10: #{gpt2_forward.9} parent=0 // pred_check
    _
  $region11: #{gpt2_forward.9} parent=0 // pred_check_branch
    %13 = sbr.rel (0) target = $region13
  $region12: #{gpt2_forward.9} parent=0 // pred_region
    _
  $region13: #{gpt2_forward.9} parent=0 // pred_fallthru
    _
  %v15 = vld [vmem:[%s0] sm:$0xff]
  %v16 = vld [vmem:[%s0 + $0x8] sm:$0xff]
  %v17 = vpack.c.bf16 %v16, %v15
  %v18 = vld [vmem:[%s1] sm:$0xf]
  %v19 = vld [vmem:[%s1 + $0x4] sm:$0xf]
  %v20 = vld [vmem:[%s1 + $0x8] sm:$0xf]
  %v21 = vld [vmem:[%s1 + $0xc] sm:$0xf]
  %v22 = vld [vmem:[%s2] sm:$0x1]
  %v24 = vlaneseq
  %v25 = vshrl.u32 %v24, 7
  %v26 = vsub.s32 0, %v25
  %v27 = vrot.slane %v22, %v26
  %v33 = vunpack.c.l.b16 %v18
  %v34 = vunpack.c.l.b16 %v19
  %v35 = vunpack.c.l.b16 %v20
  %v36 = vunpack.c.l.b16 %v21
  %v37 = vpack.c.b16 %v34, %v33
  %v38 = vpack.c.b16 %v36, %v35
  %vm41 = vcmask 261120
  %v43 = vsel %vm41, %v17, 0
  %45 = vmatprep.subr.bf16.mxu0 0
  %46 = vmatpush1.bf16.msra.mxu0 %v37
  %47 = vmatprep.subr.bf16.mxu0 0
  %48 = vmatpush1.bf16.msra.mxu0 %v38
  %49 = vmatprep.subr.bf16.mxu0 0
  %50 = vmatpush1.bf16.msra.mxu0 0
  %51 = vmatprep.subr.bf16.mxu0 0
  %52 = vmatpush1.bf16.msra.mxu0 0
  %53 = vmatprep.subr.bf16.mxu0 0
  %54 = vmatpush1.bf16.msra.mxu0 0
  %55 = vmatprep.subr.bf16.mxu0 0
  %56 = vmatpush1.bf16.msra.mxu0 0
  %57 = vmatprep.subr.bf16.mxu0 0
  %58 = vmatpush1.bf16.msra.mxu0 0
  %59 = vmatprep.subr.bf16.mxu0 0
  %60 = vmatpush1.bf16.msra.mxu0 0
  %61 = vmatprep.subr.bf16.mxu0 0
  %62 = vmatpush1.bf16.msra.mxu0 0
  %63 = vmatprep.subr.bf16.mxu0 0
  %64 = vmatpush1.bf16.msra.mxu0 0
  %65 = vmatprep.subr.bf16.mxu0 0
  %66 = vmatpush1.bf16.msra.mxu0 0
  %67 = vmatprep.subr.bf16.mxu0 0
  %68 = vmatpush1.bf16.msra.mxu0 0
  %69 = vmatprep.subr.bf16.mxu0 0
  %70 = vmatpush1.bf16.msra.mxu0 0
  %71 = vmatprep.subr.bf16.mxu0 0
  %72 = vmatpush1.bf16.msra.mxu0 0
  %73 = vmatprep.subr.bf16.mxu0 0
  %74 = vmatpush1.bf16.msra.mxu0 0
  %75 = vmatprep.subr.bf16.mxu0 0
  %76 = vmatpush1.bf16.msra.mxu0 0
  %77 = vmatprep.mubr.bf16.mxu0 0
  %78 = vmatmul.mubr.bf16.gmra.mrb[0].mxu0 %v43
  %v79 = vpop.f32.mrb[0].mxu0
  %v80 = vadd.f32 %v27, %v79
  %v81 = vpop.f32.mrb[0].mxu0
  %v82 = vpop.f32.mrb[0].mxu0
  %v83 = vadd.f32 %v27, %v82
  %v84 = vpop.f32.mrb[0].mxu0
  %85 = vdwg.mxu0
  %v86 = vpack.c.bf16 %v83, %v80
  %v88 = vunpack.c.l.b16 %v86
  %v89 = vunpack.c.h.b16 %v86
  %v90 = vpack.c.b16 %v88, %v88
  %v91 = vpack.c.b16 %v89, %v89
  %94 = vst [vmem:[%s3] sm:$0xf] %v90
  %95 = vst [vmem:[%s3 + $0x4] sm:$0xf] %v91
  // Predicated region
  $region14: #{gpt2_forward.9} parent=0 // pred_check
    _
  $region15: #{gpt2_forward.9} parent=0 // pred_check_branch
    %97 = sbr.rel (0) target = $region17
  $region16: #{gpt2_forward.9} parent=0 // pred_region
    _
  $region17: #{gpt2_forward.9} parent=0 // pred_fallthru
    _
  // Predicated region
  $region18: #{gpt2_forward.9} parent=0 // pred_check
    _
  $region19: #{gpt2_forward.9} parent=0 // pred_check_branch
    %99 = sbr.rel (0) target = $region21
  $region20: #{gpt2_forward.9} parent=0 // pred_region
    _
  $region21: #{gpt2_forward.9} parent=0 // pred_fallthru
    _

// kernel: gpt2_forward.5
$region0: #{gpt2_forward.5}
  #allocation0 [shape = 'u32[]', space=smem, size = 0x4, offset = 0x4, fixed_abs, tag = 'smem constant byte address 0x4 - core index']
  #allocation1 [shape = 'u32[144,128]{1,0:T(1,128)}', space=vmem, size = 0x12000, scoped, tag = 'internal scratch']
  #allocation2 [shape = 'bf16[4,8,8]{2,1,0:T(8,128)(2,1)}', space=vmem, size = 0x2000, scoped, tag = 'scratch operand']
  #allocation3 [shape = 'bf16[4,8,8]{2,1,0:T(8,128)(2,1)}', space=vmem, size = 0x2000, scoped, tag = 'scratch operand']
  #allocation4 [shape = 'bf16[4,8,8]{2,1,0:T(8,128)(2,1)}', space=vmem, size = 0x2000, scoped, tag = 'scratch operand']
  #allocation5 [shape = 'bf16[4,8,8]{2,1,0:T(8,128)(2,1)}', space=vmem, size = 0x2000, scoped, tag = 'scratch operand']
  #allocation6 [shape = 'bf16[8,32]{1,0:T(8,128)(2,1)}', space=vmem, size = 0x800, scoped, tag = 'scratch operand']
  %s0 = inlined_call_operand.vmem [shape: f32[2,8,32], index: 0, kind: input, shape index: {}]
  %s1 = inlined_call_operand.vmem [shape: bf16[32,32], index: 1, kind: input, shape index: {}]
  %s2 = inlined_call_operand.vmem [shape: bf16[32,32], index: 2, kind: input, shape index: {}]
  %s3 = inlined_call_operand.vmem [shape: bf16[32,32], index: 3, kind: input, shape index: {}]
  %s4 = inlined_call_operand.vmem [shape: bf16[32,32], index: 4, kind: input, shape index: {}]
  %s5 = inlined_call_operand.vmem [shape: f32[1,32], index: 5, kind: input, shape index: {}]
  %s6 = inlined_call_operand.vmem [shape: f32[1,32], index: 6, kind: input, shape index: {}]
  %s7 = inlined_call_operand.vmem [shape: f32[1,32], index: 7, kind: input, shape index: {}]
  %s8 = inlined_call_operand.vmem [shape: f32[2,8,32], index: 8, kind: output, shape index: {}]
  %s9 = sld [smem:[#allocation0]]
  $region72: #{gpt2_forward.5} parent=0
    _
  %s11 = ssub.s32 1, %s9
  %s12 = scalar_select 0, %s11, %s9
  loop: start=0, step=1, limit=4
  $region2: #{gpt2_forward.5} parent=0 // loop_pre_header
    _
  $region3: #{gpt2_forward.5} parent=0 // loop_header
    %s14 = sphi 0, %s18
    %p15 = scmp.ge.s32.totalorder %s14, 4
    %s24 = sphi 0, %s26
    %s27 = sphi 0, %s24
    %s28 = sphi 0, %s27
    %s44 = sphi 0, %s28
    %s48 = sphi 0, %s48
    %s50 = sphi 0, %s48
    %s51 = sphi 0, %s50
    %s65 = sphi 0, %s51
    %s69 = sphi 0, %s69
    %s71 = sphi 0, %s69
    %s72 = sphi 0, %s71
    %s86 = sphi 0, %s72
    %s90 = sphi 0, %s90
    %s92 = sphi 0, %s90
    %s93 = sphi 0, %s92
    %s107 = sphi 0, %s93
    %s111 = sphi 0, %s111
    %s113 = sphi 0, %s111
    %s114 = sphi 0, %s113
    %s128 = sphi 0, %s114
    %s132 = sphi 0, %s132
    %s134 = sphi 0, %s132
    %s135 = sphi 0, %s134
    %s149 = sphi 0, %s135
    %s153 = sphi 0, %s153
    %s155 = sphi 0, %s153
    %s156 = sphi 0, %s155
    %s170 = sphi 0, %s156
    %s174 = sphi 0, %s174
    %s176 = sphi 0, %s174
    %s177 = sphi 0, %s176
    %s191 = sphi 0, %s177
    %s197 = sphi 0, %s199
    %s200 = sphi 0, %s197
    %s201 = sphi 0, %s200
    %s217 = sphi 0, %s201
  $region4: #{gpt2_forward.5} parent=0 // loop_header_branch
    %17 = sbr.rel (%p15) target = $region8
  $region5: #{gpt2_forward.5} parent=0 // loop_body
    %s19 = ssub.s32 %s14, 1
    %s20 = ssub.s32 %s14, 2
    %s21 = sadd.s32 %s14, 1
    %s22 = ssub.s32 %s14, %s21
    %p23 = scmp.eq.s32.totalorder %s22, 0
    %s25 = sadd.s32 %s24, 1
    %s26 = scalar_select %p23, %s24, %s25
    %p29 = pneg %p23
    %p30 = scmp.eq.s32.totalorder %s14, 1
    %p31 = por %p29, %p30
    %p32 = scmp.ne.s32.totalorder %s24, %s27
    %p33 = scmp.eq.s32.totalorder %s14, 0
    %p34 = por %p32, %p33
    %p35 = scmp.ne.s32.totalorder %s24, %s27
    %p36 = scmp.eq.s32.totalorder %s19, 1
    %p37 = por %p35, %p36
    %p38 = scmp.ne.s32.totalorder %s27, %s28
    %p39 = scmp.eq.s32.totalorder %s19, 0
    %p40 = por %p38, %p39
    %p41 = scmp.ne.s32.totalorder %s27, %s28
    %p42 = scmp.eq.s32.totalorder %s20, 1
    %p43 = por %p41, %p42
    %p45 = scmp.ne.s32.totalorder %s28, %s44
    %p46 = scmp.eq.s32.totalorder %s20, 0
    %p47 = por %p45, %p46
    %s49 = sadd.s32 %s48, 1
    %p52 = scmp.eq.s32.totalorder %s14, 1
    %p53 = scmp.ne.s32.totalorder %s48, %s50
    %p54 = scmp.eq.s32.totalorder %s14, 0
    %p55 = por %p53, %p54
    %p56 = scmp.ne.s32.totalorder %s48, %s50
    %p57 = scmp.eq.s32.totalorder %s19, 1
    %p58 = por %p56, %p57
    %p59 = scmp.ne.s32.totalorder %s50, %s51
    %p60 = scmp.eq.s32.totalorder %s19, 0
    %p61 = por %p59, %p60
    %p62 = scmp.ne.s32.totalorder %s50, %s51
    %p63 = scmp.eq.s32.totalorder %s20, 1
    %p64 = por %p62, %p63
    %p66 = scmp.ne.s32.totalorder %s51, %s65
    %p67 = scmp.eq.s32.totalorder %s20, 0
    %p68 = por %p66, %p67
    %s70 = sadd.s32 %s69, 1
    %p73 = scmp.eq.s32.totalorder %s14, 1
    %p74 = scmp.ne.s32.totalorder %s69, %s71
    %p75 = scmp.eq.s32.totalorder %s14, 0
    %p76 = por %p74, %p75
    %p77 = scmp.ne.s32.totalorder %s69, %s71
    %p78 = scmp.eq.s32.totalorder %s19, 1
    %p79 = por %p77, %p78
    %p80 = scmp.ne.s32.totalorder %s71, %s72
    %p81 = scmp.eq.s32.totalorder %s19, 0
    %p82 = por %p80, %p81
    %p83 = scmp.ne.s32.totalorder %s71, %s72
    %p84 = scmp.eq.s32.totalorder %s20, 1
    %p85 = por %p83, %p84
    %p87 = scmp.ne.s32.totalorder %s72, %s86
    %p88 = scmp.eq.s32.totalorder %s20, 0
    %p89 = por %p87, %p88
    %s91 = sadd.s32 %s90, 1
    %p94 = scmp.eq.s32.totalorder %s14, 1
    %p95 = scmp.ne.s32.totalorder %s90, %s92
    %p96 = scmp.eq.s32.totalorder %s14, 0
    %p97 = por %p95, %p96
    %p98 = scmp.ne.s32.totalorder %s90, %s92
    %p99 = scmp.eq.s32.totalorder %s19, 1
    %p100 = por %p98, %p99
    %p101 = scmp.ne.s32.totalorder %s92, %s93
    %p102 = scmp.eq.s32.totalorder %s19, 0
    %p103 = por %p101, %p102
    %p104 = scmp.ne.s32.totalorder %s92, %s93
    %p105 = scmp.eq.s32.totalorder %s20, 1
    %p106 = por %p104, %p105
    %p108 = scmp.ne.s32.totalorder %s93, %s107
    %p109 = scmp.eq.s32.totalorder %s20, 0
    %p110 = por %p108, %p109
    %s112 = sadd.s32 %s111, 1
    %p115 = scmp.eq.s32.totalorder %s14, 1
    %p116 = scmp.ne.s32.totalorder %s111, %s113
    %p117 = scmp.eq.s32.totalorder %s14, 0
    %p118 = por %p116, %p117
    %p119 = scmp.ne.s32.totalorder %s111, %s113
    %p120 = scmp.eq.s32.totalorder %s19, 1
    %p121 = por %p119, %p120
    %p122 = scmp.ne.s32.totalorder %s113, %s114
    %p123 = scmp.eq.s32.totalorder %s19, 0
    %p124 = por %p122, %p123
    %p125 = scmp.ne.s32.totalorder %s113, %s114
    %p126 = scmp.eq.s32.totalorder %s20, 1
    %p127 = por %p125, %p126
    %p129 = scmp.ne.s32.totalorder %s114, %s128
    %p130 = scmp.eq.s32.totalorder %s20, 0
    %p131 = por %p129, %p130
    %s133 = sadd.s32 %s132, 1
    %p136 = scmp.eq.s32.totalorder %s14, 1
    %p137 = scmp.ne.s32.totalorder %s132, %s134
    %p138 = scmp.eq.s32.totalorder %s14, 0
    %p139 = por %p137, %p138
    %p140 = scmp.ne.s32.totalorder %s132, %s134
    %p141 = scmp.eq.s32.totalorder %s19, 1
    %p142 = por %p140, %p141
    %p143 = scmp.ne.s32.totalorder %s134, %s135
    %p144 = scmp.eq.s32.totalorder %s19, 0
    %p145 = por %p143, %p144
    %p146 = scmp.ne.s32.totalorder %s134, %s135
    %p147 = scmp.eq.s32.totalorder %s20, 1
    %p148 = por %p146, %p147
    %p150 = scmp.ne.s32.totalorder %s135, %s149
    %p151 = scmp.eq.s32.totalorder %s20, 0
    %p152 = por %p150, %p151
    %s154 = sadd.s32 %s153, 1
    %p157 = scmp.eq.s32.totalorder %s14, 1
    %p158 = scmp.ne.s32.totalorder %s153, %s155
    %p159 = scmp.eq.s32.totalorder %s14, 0
    %p160 = por %p158, %p159
    %p161 = scmp.ne.s32.totalorder %s153, %s155
    %p162 = scmp.eq.s32.totalorder %s19, 1
    %p163 = por %p161, %p162
    %p164 = scmp.ne.s32.totalorder %s155, %s156
    %p165 = scmp.eq.s32.totalorder %s19, 0
    %p166 = por %p164, %p165
    %p167 = scmp.ne.s32.totalorder %s155, %s156
    %p168 = scmp.eq.s32.totalorder %s20, 1
    %p169 = por %p167, %p168
    %p171 = scmp.ne.s32.totalorder %s156, %s170
    %p172 = scmp.eq.s32.totalorder %s20, 0
    %p173 = por %p171, %p172
    %s175 = sadd.s32 %s174, 1
    %p178 = scmp.eq.s32.totalorder %s14, 1
    %p179 = scmp.ne.s32.totalorder %s174, %s176
    %p180 = scmp.eq.s32.totalorder %s14, 0
    %p181 = por %p179, %p180
    %p182 = scmp.ne.s32.totalorder %s174, %s176
    %p183 = scmp.eq.s32.totalorder %s19, 1
    %p184 = por %p182, %p183
    %p185 = scmp.ne.s32.totalorder %s176, %s177
    %p186 = scmp.eq.s32.totalorder %s19, 0
    %p187 = por %p185, %p186
    %p188 = scmp.ne.s32.totalorder %s176, %s177
    %p189 = scmp.eq.s32.totalorder %s20, 1
    %p190 = por %p188, %p189
    %p192 = scmp.ne.s32.totalorder %s177, %s191
    %p193 = scmp.eq.s32.totalorder %s20, 0
    %p194 = por %p192, %p193
    %s195 = ssub.s32 %s14, %s21
    %p196 = scmp.eq.s32.totalorder %s195, 0
    %s198 = sadd.s32 %s197, 1
    %s199 = scalar_select %p196, %s197, %s198
    %p202 = pneg %p196
    %p203 = scmp.eq.s32.totalorder %s14, 1
    %p204 = por %p202, %p203
    %p205 = scmp.ne.s32.totalorder %s197, %s200
    %p206 = scmp.eq.s32.totalorder %s14, 0
    %p207 = por %p205, %p206
    %p208 = scmp.ne.s32.totalorder %s197, %s200
    %p209 = scmp.eq.s32.totalorder %s19, 1
    %p210 = por %p208, %p209
    %p211 = scmp.ne.s32.totalorder %s200, %s201
    %p212 = scmp.eq.s32.totalorder %s19, 0
    %p213 = por %p211, %p212
    %p214 = scmp.ne.s32.totalorder %s200, %s201
    %p215 = scmp.eq.s32.totalorder %s20, 1
    %p216 = por %p214, %p215
    %p218 = scmp.ne.s32.totalorder %s201, %s217
    %p219 = scmp.eq.s32.totalorder %s20, 0
    %p220 = por %p218, %p219
    %p221 = scmp.le.s32.totalorder 1, %s14
    %p222 = scmp.lt.s32.totalorder %s14, 3
    %p223 = pnand %p221, %p222
    %p224 = pneg %p223
    // Predicated region
    $region9: #{gpt2_forward.5} parent=5 // pred_check
      _
    $region10: #{gpt2_forward.5} parent=5 // pred_check_branch
      %226 = sbr.rel (%p223) target = $region12
    $region11: #{gpt2_forward.5} parent=5 // pred_region
      %s227 = ssub.s32 %s14, 1
      // Predicated region
      $region13: #{gpt2_forward.5} parent=11 // pred_check
        %p228 = pneg %p61
      $region14: #{gpt2_forward.5} parent=11 // pred_check_branch
        %230 = sbr.rel (%p228) target = $region16
      $region15: #{gpt2_forward.5} parent=11 // pred_region
        _
      $region16: #{gpt2_forward.5} parent=11 // pred_fallthru
        _
      // Predicated region
      $region17: #{gpt2_forward.5} parent=11 // pred_check
        %p231 = pneg %p82
      $region18: #{gpt2_forward.5} parent=11 // pred_check_branch
        %233 = sbr.rel (%p231) target = $region20
      $region19: #{gpt2_forward.5} parent=11 // pred_region
        _
      $region20: #{gpt2_forward.5} parent=11 // pred_fallthru
        _
      // Predicated region
      $region21: #{gpt2_forward.5} parent=11 // pred_check
        %p234 = pneg %p103
      $region22: #{gpt2_forward.5} parent=11 // pred_check_branch
        %236 = sbr.rel (%p234) target = $region24
      $region23: #{gpt2_forward.5} parent=11 // pred_region
        _
      $region24: #{gpt2_forward.5} parent=11 // pred_fallthru
        _
      // Predicated region
      $region25: #{gpt2_forward.5} parent=11 // pred_check
        %p237 = pneg %p124
      $region26: #{gpt2_forward.5} parent=11 // pred_check_branch
        %239 = sbr.rel (%p237) target = $region28
      $region27: #{gpt2_forward.5} parent=11 // pred_region
        _
      $region28: #{gpt2_forward.5} parent=11 // pred_fallthru
        _
      // Predicated region
      $region29: #{gpt2_forward.5} parent=11 // pred_check
        %p240 = pneg %p145
      $region30: #{gpt2_forward.5} parent=11 // pred_check_branch
        %242 = sbr.rel (%p240) target = $region32
      $region31: #{gpt2_forward.5} parent=11 // pred_region
        _
      $region32: #{gpt2_forward.5} parent=11 // pred_fallthru
        _
      // Predicated region
      $region33: #{gpt2_forward.5} parent=11 // pred_check
        %p243 = pneg %p166
      $region34: #{gpt2_forward.5} parent=11 // pred_check_branch
        %245 = sbr.rel (%p243) target = $region36
      $region35: #{gpt2_forward.5} parent=11 // pred_region
        _
      $region36: #{gpt2_forward.5} parent=11 // pred_fallthru
        _
      // Predicated region
      $region37: #{gpt2_forward.5} parent=11 // pred_check
        %p246 = pneg %p187
      $region38: #{gpt2_forward.5} parent=11 // pred_check_branch
        %248 = sbr.rel (%p246) target = $region40
      $region39: #{gpt2_forward.5} parent=11 // pred_region
        _
      $region40: #{gpt2_forward.5} parent=11 // pred_fallthru
        _
    $region12: #{gpt2_forward.5} parent=5 // pred_fallthru
      _
    %p249 = scmp.lt.s32.totalorder %s14, 2
    // Predicated region
    $region41: #{gpt2_forward.5} parent=5 // pred_check
      %p250 = pneg %p249
    $region42: #{gpt2_forward.5} parent=5 // pred_check_branch
      %252 = sbr.rel (%p250) target = $region44
    $region43: #{gpt2_forward.5} parent=5 // pred_region
      // Predicated region
      $region45: #{gpt2_forward.5} parent=43 // pred_check
        %p253 = pneg %p34
      $region46: #{gpt2_forward.5} parent=43 // pred_check_branch
        %255 = sbr.rel (%p253) target = $region48
      $region47: #{gpt2_forward.5} parent=43 // pred_region
        %p256 = scmp.lt.s32.totalorder %s14, 1
        %s257 = scalar_select %p256, %s14, 1
        %s258 = smul.addr %s257, 8
        %s259 = scalar_lea.vmem %s0, %s258
      $region48: #{gpt2_forward.5} parent=43 // pred_fallthru
        _
    $region44: #{gpt2_forward.5} parent=5 // pred_fallthru
      _
    %p260 = scmp.le.s32.totalorder 1, %s14
    %p261 = scmp.lt.s32.totalorder %s14, 3
    %p262 = pnand %p260, %p261
    %p263 = pneg %p262
    // Predicated region
    $region49: #{gpt2_forward.5} parent=5 // pred_check
      _
    $region50: #{gpt2_forward.5} parent=5 // pred_check_branch
      %265 = sbr.rel (%p262) target = $region52
    $region51: #{gpt2_forward.5} parent=5 // pred_region
      %s266 = ssub.s32 %s14, 1
      %p267 = scmp.lt.s32.totalorder %s19, 1
      %s268 = scalar_select %p267, %s19, 1
      %s269 = smul.addr %s268, 8
      %s270 = scalar_lea.vmem %s0, %s269
      %p271 = pneg %p40
      %p272 = pneg %p37
      %p273 = pneg %p61
      %p274 = pneg %p58
      %p275 = pneg %p82
      %p276 = pneg %p79
      %p277 = pneg %p103
      %p278 = pneg %p100
      %p279 = pneg %p124
      %p280 = pneg %p121
      %p281 = pneg %p145
      %p282 = pneg %p142
      %p283 = pneg %p166
      %p284 = pneg %p163
      %p285 = pneg %p187
      %p286 = pneg %p184
      %p287 = pneg %p213
      %p288 = pneg %p210
      %p289 = scmp.lt.s32.totalorder %s19, 1
      %s290 = scalar_select %p289, %s19, 1
      %s291 = smul.addr %s290, 8
      %s292 = scalar_lea.vmem %s8, %s291
      %p293 = scmp.lt.s32.totalorder %s19, 1
      %s294 = scalar_select %p293, %s19, 1
      %s295 = smul.addr %s294, 8
      %s296 = scalar_lea.vmem %s0, %s295
      %p297 = scmp.lt.s32.totalorder %s19, 1
      %s298 = scalar_select %p297, %s19, 1
      %s299 = smul.addr %s298, 8
      %s300 = scalar_lea.vmem %s8, %s299
      %v302 = vld [vmem:[%s296] sm:$0xff]
      %v303 = vpack.c.bf16 %v302, %v302
      %v304 = vld [vmem:[%s1] sm:$0xf]
      %v305 = vld [vmem:[%s1 + $0x4] sm:$0xf]
      %v306 = vld [vmem:[%s1 + $0x8] sm:$0xf]
      %v307 = vld [vmem:[%s1 + $0xc] sm:$0xf]
      %v312 = vunpack.c.l.b16 %v304
      %v313 = vunpack.c.l.b16 %v305
      %v314 = vunpack.c.l.b16 %v306
      %v315 = vunpack.c.l.b16 %v307
      %v316 = vpack.c.b16 %v313, %v312
      %v317 = vpack.c.b16 %v315, %v314
      %vm320 = vcmask 261120
      %v322 = vsel %vm320, %v303, 0
      %324 = vmatprep.subr.bf16.mxu0 0
      %325 = vmatpush1.bf16.msra.mxu0 %v316
      %326 = vmatprep.subr.bf16.mxu0 0
      %327 = vmatpush1.bf16.msra.mxu0 %v317
      %328 = vmatprep.subr.bf16.mxu0 0
      %329 = vmatpush1.bf16.msra.mxu0 0
      %330 = vmatprep.subr.bf16.mxu0 0
      %331 = vmatpush1.bf16.msra.mxu0 0
      %332 = vmatprep.subr.bf16.mxu0 0
      %333 = vmatpush1.bf16.msra.mxu0 0
      %334 = vmatprep.subr.bf16.mxu0 0
      %335 = vmatpush1.bf16.msra.mxu0 0
      %336 = vmatprep.subr.bf16.mxu0 0
      %337 = vmatpush1.bf16.msra.mxu0 0
      %338 = vmatprep.subr.bf16.mxu0 0
      %339 = vmatpush1.bf16.msra.mxu0 0
      %340 = vmatprep.subr.bf16.mxu0 0
      %341 = vmatpush1.bf16.msra.mxu0 0
      %342 = vmatprep.subr.bf16.mxu0 0
      %343 = vmatpush1.bf16.msra.mxu0 0
      %344 = vmatprep.subr.bf16.mxu0 0
      %345 = vmatpush1.bf16.msra.mxu0 0
      %346 = vmatprep.subr.bf16.mxu0 0
      %347 = vmatpush1.bf16.msra.mxu0 0
      %348 = vmatprep.subr.bf16.mxu0 0
      %349 = vmatpush1.bf16.msra.mxu0 0
      %350 = vmatprep.subr.bf16.mxu0 0
      %351 = vmatpush1.bf16.msra.mxu0 0
      %352 = vmatprep.subr.bf16.mxu0 0
      %353 = vmatpush1.bf16.msra.mxu0 0
      %354 = vmatprep.subr.bf16.mxu0 0
      %355 = vmatpush1.bf16.msra.mxu0 0
      %356 = vmatprep.mubr.bf16.mxu0 0
      %357 = vmatmul.mubr.bf16.gmra.mrb[0].mxu0 %v322
      %v358 = vpop.f32.mrb[0].mxu0
      %v359 = vadd.f32 0.0, %v358
      %v360 = vpop.f32.mrb[0].mxu0
      %v361 = vpop.f32.mrb[0].mxu0
      %v362 = vpop.f32.mrb[0].mxu0
      %363 = vdwg.mxu0
      %v364 = vpack.c.bf16 %v359, %v359
      %v365 = vld [vmem:[%s2] sm:$0xf]
      %v366 = vld [vmem:[%s2 + $0x4] sm:$0xf]
      %v367 = vld [vmem:[%s2 + $0x8] sm:$0xf]
      %v368 = vld [vmem:[%s2 + $0xc] sm:$0xf]
      %v373 = vunpack.c.l.b16 %v365
      %v374 = vunpack.c.l.b16 %v366
      %v375 = vunpack.c.l.b16 %v367
      %v376 = vunpack.c.l.b16 %v368
      %v377 = vpack.c.b16 %v374, %v373
      %v378 = vpack.c.b16 %v376, %v375
      %381 = vmatprep.subr.bf16.mxu0 0
      %382 = vmatpush1.bf16.msra.mxu0 %v377
      %383 = vmatprep.subr.bf16.mxu0 0
      %384 = vmatpush1.bf16.msra.mxu0 %v378
      %385 = vmatprep.subr.bf16.mxu0 0
      %386 = vmatpush1.bf16.msra.mxu0 0
      %387 = vmatprep.subr.bf16.mxu0 0
      %388 = vmatpush1.bf16.msra.mxu0 0
      %389 = vmatprep.subr.bf16.mxu0 0
      %390 = vmatpush1.bf16.msra.mxu0 0
      %391 = vmatprep.subr.bf16.mxu0 0
      %392 = vmatpush1.bf16.msra.mxu0 0
      %393 = vmatprep.subr.bf16.mxu0 0
      %394 = vmatpush1.bf16.msra.mxu0 0
      %395 = vmatprep.subr.bf16.mxu0 0
      %396 = vmatpush1.bf16.msra.mxu0 0
      %397 = vmatprep.subr.bf16.mxu0 0
      %398 = vmatpush1.bf16.msra.mxu0 0
      %399 = vmatprep.subr.bf16.mxu0 0
      %400 = vmatpush1.bf16.msra.mxu0 0
      %401 = vmatprep.subr.bf16.mxu0 0
      %402 = vmatpush1.bf16.msra.mxu0 0
      %403 = vmatprep.subr.bf16.mxu0 0
      %404 = vmatpush1.bf16.msra.mxu0 0
      %405 = vmatprep.subr.bf16.mxu0 0
      %406 = vmatpush1.bf16.msra.mxu0 0
      %407 = vmatprep.subr.bf16.mxu0 0
      %408 = vmatpush1.bf16.msra.mxu0 0
      %409 = vmatprep.subr.bf16.mxu0 0
      %410 = vmatpush1.bf16.msra.mxu0 0
      %411 = vmatprep.subr.bf16.mxu0 0
      %412 = vmatpush1.bf16.msra.mxu0 0
      %413 = vmatprep.mubr.bf16.mxu0 0
      %414 = vmatmul.mubr.bf16.gmra.mrb[0].mxu0 %v322
      %v415 = vpop.f32.mrb[0].mxu0
      %v416 = vadd.f32 0.0, %v415
      %v417 = vpop.f32.mrb[0].mxu0
      %v418 = vpop.f32.mrb[0].mxu0
      %v419 = vpop.f32.mrb[0].mxu0
      %420 = vdwg.mxu0
      %v421 = vpack.c.bf16 %v416, %v416
      %v422 = vld [vmem:[%s3] sm:$0xf]
      %v423 = vld [vmem:[%s3 + $0x4] sm:$0xf]
      %v424 = vld [vmem:[%s3 + $0x8] sm:$0xf]
      %v425 = vld [vmem:[%s3 + $0xc] sm:$0xf]
      %v430 = vunpack.c.l.b16 %v422
      %v431 = vunpack.c.l.b16 %v423
      %v432 = vunpack.c.l.b16 %v424
      %v433 = vunpack.c.l.b16 %v425
      %v434 = vpack.c.b16 %v431, %v430
      %v435 = vpack.c.b16 %v433, %v432
      %438 = vmatprep.subr.bf16.mxu0 0
      %439 = vmatpush1.bf16.msra.mxu0 %v434
      %440 = vmatprep.subr.bf16.mxu0 0
      %441 = vmatpush1.bf16.msra.mxu0 %v435
      %442 = vmatprep.subr.bf16.mxu0 0
      %443 = vmatpush1.bf16.msra.mxu0 0
      %444 = vmatprep.subr.bf16.mxu0 0
      %445 = vmatpush1.bf16.msra.mxu0 0
      %446 = vmatprep.subr.bf16.mxu0 0
      %447 = vmatpush1.bf16.msra.mxu0 0
      %448 = vmatprep.subr.bf16.mxu0 0
      %449 = vmatpush1.bf16.msra.mxu0 0
      %450 = vmatprep.subr.bf16.mxu0 0
      %451 = vmatpush1.bf16.msra.mxu0 0
      %452 = vmatprep.subr.bf16.mxu0 0
      %453 = vmatpush1.bf16.msra.mxu0 0
      %454 = vmatprep.subr.bf16.mxu0 0
      %455 = vmatpush1.bf16.msra.mxu0 0
      %456 = vmatprep.subr.bf16.mxu0 0
      %457 = vmatpush1.bf16.msra.mxu0 0
      %458 = vmatprep.subr.bf16.mxu0 0
      %459 = vmatpush1.bf16.msra.mxu0 0
      %460 = vmatprep.subr.bf16.mxu0 0
      %461 = vmatpush1.bf16.msra.mxu0 0
      %462 = vmatprep.subr.bf16.mxu0 0
      %463 = vmatpush1.bf16.msra.mxu0 0
      %464 = vmatprep.subr.bf16.mxu0 0
      %465 = vmatpush1.bf16.msra.mxu0 0
      %466 = vmatprep.subr.bf16.mxu0 0
      %467 = vmatpush1.bf16.msra.mxu0 0
      %468 = vmatprep.subr.bf16.mxu0 0
      %469 = vmatpush1.bf16.msra.mxu0 0
      %470 = vmatprep.mubr.bf16.mxu0 0
      %471 = vmatmul.mubr.bf16.gmra.mrb[0].mxu0 %v322
      %v472 = vpop.f32.mrb[0].mxu0
      %v473 = vadd.f32 0.0, %v472
      %v474 = vpop.f32.mrb[0].mxu0
      %v475 = vpop.f32.mrb[0].mxu0
      %v476 = vpop.f32.mrb[0].mxu0
      %477 = vdwg.mxu0
      %v478 = vpack.c.bf16 %v473, %v473
      %vm479 = vcmask 60416
      %480 = vst.msk [vmem:[#allocation2] sm:$0xf] %vm479, %v364
      %481 = vst.msk [vmem:[#allocation3] sm:$0xf] %vm479, %v421
      %482 = vst.msk [vmem:[#allocation4] sm:$0xf] %vm479, %v478
      %v484 = vunpack.c.l.b16 %v364
      %v485 = vpack.c.b16 %v484, %v484
      %486 = vrot.lane.b32.xlu0 %v485, 120
      %v487 = vpop.permute.xlu0 %486
      %s489 = scalar_lea.vmem [#allocation2], 4
      %490 = vst.msk [vmem:[%s489] sm:$0xf] %vm479, %v487
      %v492 = vunpack.c.l.b16 %v421
      %v493 = vpack.c.b16 %v492, %v492
      %494 = vrot.lane.b32.xlu0 %v493, 120
      %v495 = vpop.permute.xlu0 %494
      %s497 = scalar_lea.vmem [#allocation3], 4
      %498 = vst.msk [vmem:[%s497] sm:$0xf] %vm479, %v495
      %v500 = vunpack.c.l.b16 %v478
      %v501 = vpack.c.b16 %v500, %v500
      %502 = vrot.lane.b32.xlu0 %v501, 120
      %v503 = vpop.permute.xlu0 %502
      %s505 = scalar_lea.vmem [#allocation4], 4
      %506 = vst.msk [vmem:[%s505] sm:$0xf] %vm479, %v503
      %507 = vrot.lane.b32.xlu0 %v485, 112
      %v508 = vpop.permute.xlu0 %507
      %s510 = scalar_lea.vmem [#allocation2], 8
      %511 = vst.msk [vmem:[%s510] sm:$0xf] %vm479, %v508
      %512 = vrot.lane.b32.xlu0 %v493, 112
      %v513 = vpop.permute.xlu0 %512
      %s515 = scalar_lea.vmem [#allocation3], 8
      %516 = vst.msk [vmem:[%s515] sm:$0xf] %vm479, %v513
      %517 = vrot.lane.b32.xlu0 %v501, 112
      %v518 = vpop.permute.xlu0 %517
      %s520 = scalar_lea.vmem [#allocation4], 8
      %521 = vst.msk [vmem:[%s520] sm:$0xf] %vm479, %v518
      %522 = vrot.lane.b32.xlu0 %v485, 104
      %v523 = vpop.permute.xlu0 %522
      %s525 = scalar_lea.vmem [#allocation2], 12
      %526 = vst.msk [vmem:[%s525] sm:$0xf] %vm479, %v523
      %527 = vrot.lane.b32.xlu0 %v493, 104
      %v528 = vpop.permute.xlu0 %527
      %s530 = scalar_lea.vmem [#allocation3], 12
      %531 = vst.msk [vmem:[%s530] sm:$0xf] %vm479, %v528
      %532 = vrot.lane.b32.xlu0 %v501, 104
      %v533 = vpop.permute.xlu0 %532
      %s535 = scalar_lea.vmem [#allocation4], 12
      %536 = vst.msk [vmem:[%s535] sm:$0xf] %vm479, %v533
      %v537 = vlaneseq
      %v538 = vshrl.u32 %v537, 7
      %v539 = vlaneseq
      %v540 = vand.u32 %v539, 127
      %vm541 = vcmp.ge.s32.totalorder %v538, %v540
      %v542 = vsel %vm541, 0.0, -1e+20
      loop: start=0, step=1, limit=4
      $region53: #{gpt2_forward.5} parent=51 // loop_pre_header
        _
      $region54: #{gpt2_forward.5} parent=51 // loop_header
        %s544 = sphi 0, %s548
        %p545 = scmp.ge.s32.totalorder %s544, 4
      $region55: #{gpt2_forward.5} parent=51 // loop_header_branch
        %547 = sbr.rel (%p545) target = $region59
      $region56: #{gpt2_forward.5} parent=51 // loop_body
        %s549 = smul.addr %s544, 4
        %s550 = scalar_lea.vmem [#allocation2], %s549
        %v551 = vld [vmem:[%s550] sm:$0xf]
        %s552 = smul.addr %s544, 4
        %s553 = scalar_lea.vmem [#allocation3], %s552
        %v554 = vld [vmem:[%s553] sm:$0xf]
        %s555 = smul.addr %s544, 4
        %s556 = scalar_lea.vmem [#allocation4], %s555
        %v557 = vld [vmem:[%s556] sm:$0xf]
        %vm558 = vcmask 64512
        %v560 = vsel %vm558, %v551, 0
        %v563 = vsel %vm558, %v554, 0
        %565 = vmatprep.subr.bf16.mxu0 0
        %566 = vmatpush1.bf16.xpose.msra.mxu0 %v563
        %567 = vmatprep.subr.bf16.mxu0 0
        %568 = vmatpush1.bf16.xpose.msra.mxu0 0
        %569 = vmatprep.subr.bf16.mxu0 0
        %570 = vmatpush1.bf16.xpose.msra.mxu0 0
        %571 = vmatprep.subr.bf16.mxu0 0
        %572 = vmatpush1.bf16.xpose.msra.mxu0 0
        %573 = vmatprep.subr.bf16.mxu0 0
        %574 = vmatpush1.bf16.xpose.msra.mxu0 0
        %575 = vmatprep.subr.bf16.mxu0 0
        %576 = vmatpush1.bf16.xpose.msra.mxu0 0
        %577 = vmatprep.subr.bf16.mxu0 0
        %578 = vmatpush1.bf16.xpose.msra.mxu0 0
        %579 = vmatprep.subr.bf16.mxu0 0
        %580 = vmatpush1.bf16.xpose.msra.mxu0 0
        %581 = vmatprep.subr.bf16.mxu0 0
        %582 = vmatpush1.bf16.xpose.msra.mxu0 0
        %583 = vmatprep.subr.bf16.mxu0 0
        %584 = vmatpush1.bf16.xpose.msra.mxu0 0
        %585 = vmatprep.subr.bf16.mxu0 0
        %586 = vmatpush1.bf16.xpose.msra.mxu0 0
        %587 = vmatprep.subr.bf16.mxu0 0
        %588 = vmatpush1.bf16.xpose.msra.mxu0 0
        %589 = vmatprep.subr.bf16.mxu0 0
        %590 = vmatpush1.bf16.xpose.msra.mxu0 0
        %591 = vmatprep.subr.bf16.mxu0 0
        %592 = vmatpush1.bf16.xpose.msra.mxu0 0
        %593 = vmatprep.subr.bf16.mxu0 0
        %594 = vmatpush1.bf16.xpose.msra.mxu0 0
        %595 = vmatprep.subr.bf16.mxu0 0
        %596 = vmatpush1.bf16.xpose.msra.mxu0 0
        %597 = vmatprep.mubr.bf16.mxu0 0
        %598 = vmatmul.mubr.bf16.gmra.mrb[0].mxu0 %v560
        %v599 = vpop.f32.mrb[0].mxu0
        %v600 = vadd.f32 %v542, %v599
        %v601 = vpop.f32.mrb[0].mxu0
        %v602 = vpop.f32.mrb[0].mxu0
        %v603 = vpop.f32.mrb[0].mxu0
        %604 = vdwg.mxu0
        %v605 = vsel %vm558, %v600, -inf
        %606 = vmax.xlane.f32.xlu0 %v605
        %v607 = vpop.xlane.xlu0 %606
        %v608 = vsub.f32 %v600, %v607
        %v609 = vmul.f32 %v608, 1.442695
        %v610 = vpow.pop %v609
        %v611 = vsel %vm558, %v610, 0.0
        %612 = vadd.xlane.f32.xlu0 %v611
        %v613 = vpop.xlane.xlu0 %612
        %v614 = vrcp.pop %v613
        %v615 = vmul.f32 %v610, %v614
        %v616 = vpack.c.bf16 %v615, %v615
        %v618 = vsel %vm558, %v616, 0
        %vm620 = vcmask 1043456
        %v622 = vsel %vm620, %v557, 0
        %624 = vmatprep.subr.bf16.mxu0 0
        %625 = vmatpush1.bf16.msra.mxu0 %v622
        %626 = vmatprep.subr.bf16.mxu0 0
        %627 = vmatpush1.bf16.msra.mxu0 0
        %628 = vmatprep.subr.bf16.mxu0 0
        %629 = vmatpush1.bf16.msra.mxu0 0
        %630 = vmatprep.subr.bf16.mxu0 0
        %631 = vmatpush1.bf16.msra.mxu0 0
        %632 = vmatprep.subr.bf16.mxu0 0
        %633 = vmatpush1.bf16.msra.mxu0 0
        %634 = vmatprep.subr.bf16.mxu0 0
        %635 = vmatpush1.bf16.msra.mxu0 0
        %636 = vmatprep.subr.bf16.mxu0 0
        %637 = vmatpush1.bf16.msra.mxu0 0
        %638 = vmatprep.subr.bf16.mxu0 0
        %639 = vmatpush1.bf16.msra.mxu0 0
        %640 = vmatprep.subr.bf16.mxu0 0
        %641 = vmatpush1.bf16.msra.mxu0 0
        %642 = vmatprep.subr.bf16.mxu0 0
        %643 = vmatpush1.bf16.msra.mxu0 0
        %644 = vmatprep.subr.bf16.mxu0 0
        %645 = vmatpush1.bf16.msra.mxu0 0
        %646 = vmatprep.subr.bf16.mxu0 0
        %647 = vmatpush1.bf16.msra.mxu0 0
        %648 = vmatprep.subr.bf16.mxu0 0
        %649 = vmatpush1.bf16.msra.mxu0 0
        %650 = vmatprep.subr.bf16.mxu0 0
        %651 = vmatpush1.bf16.msra.mxu0 0
        %652 = vmatprep.subr.bf16.mxu0 0
        %653 = vmatpush1.bf16.msra.mxu0 0
        %654 = vmatprep.subr.bf16.mxu0 0
        %655 = vmatpush1.bf16.msra.mxu0 0
        %656 = vmatprep.mubr.bf16.mxu0 0
        %657 = vmatmul.mubr.bf16.gmra.mrb[0].mxu0 %v618
        %v658 = vpop.f32.mrb[0].mxu0
        %v659 = vadd.f32 0.0, %v658
        %v660 = vpop.f32.mrb[0].mxu0
        %v661 = vpop.f32.mrb[0].mxu0
        %v662 = vpop.f32.mrb[0].mxu0
        %663 = vdwg.mxu0
        %v664 = vpack.c.bf16 %v659, %v659
        %s665 = smul.addr %s544, 4
        %s666 = scalar_lea.vmem [#allocation5], %s665
        %667 = vst.msk [vmem:[%s666] sm:$0xf] %vm479, %v664
      $region57: #{gpt2_forward.5} parent=51 // loop_footer
        %s548 = sadd.s32 1, %s544
      $region58: #{gpt2_forward.5} parent=51 // loop_footer_branch
        %543 = sbr.rel target = $region54
      $region59: #{gpt2_forward.5} parent=51 // loop_exit
        _
      %v668 = vld [vmem:[#allocation5] sm:$0xf]
      %669 = vst.msk [vmem:[#allocation6] sm:$0xf] %vm479, %v668
      %s670 = scalar_lea.vmem [#allocation5], 4
      %v671 = vld [vmem:[%s670] sm:$0xf]
      %673 = vrot.lane.b32.xlu0 %v671, 8
      %v674 = vpop.permute.xlu0 %673
      %vm676 = vcmask 126016
      %677 = vst.msk [vmem:[#allocation6] sm:$0xf] %vm676, %v674
      %s678 = scalar_lea.vmem [#allocation5], 8
      %v679 = vld [vmem:[%s678] sm:$0xf]
      %681 = vrot.lane.b32.xlu0 %v679, 16
      %v682 = vpop.permute.xlu0 %681
      %vm684 = vcmask 191616
      %685 = vst.msk [vmem:[#allocation6] sm:$0xf] %vm684, %v682
      %s686 = scalar_lea.vmem [#allocation5], 12
      %v687 = vld [vmem:[%s686] sm:$0xf]
      %689 = vrot.lane.b32.xlu0 %v687, 24
      %v690 = vpop.permute.xlu0 %689
      %vm692 = vcmask 257216
      %693 = vst.msk [vmem:[#allocation6] sm:$0xf] %vm692, %v690
      %v694 = vld [vmem:[#allocation6] sm:$0xf]
      %v695 = vld [vmem:[%s4] sm:$0xf]
      %v696 = vld [vmem:[%s4 + $0x4] sm:$0xf]
      %v697 = vld [vmem:[%s4 + $0x8] sm:$0xf]
      %v698 = vld [vmem:[%s4 + $0xc] sm:$0xf]
      %v699 = vld [vmem:[%s5] sm:$0x1]
      %v701 = vlaneseq
      %v702 = vshrl.u32 %v701, 7
      %v703 = vsub.s32 0, %v702
      %v704 = vrot.slane %v699, %v703
      %v710 = vunpack.c.l.b16 %v695
      %v711 = vunpack.c.l.b16 %v696
      %v712 = vunpack.c.l.b16 %v697
      %v713 = vunpack.c.l.b16 %v698
      %v714 = vpack.c.b16 %v711, %v710
      %v715 = vpack.c.b16 %v713, %v712
      %v719 = vsel %vm320, %v694, 0
      %721 = vmatprep.subr.bf16.mxu0 0
      %722 = vmatpush1.bf16.msra.mxu0 %v714
      %723 = vmatprep.subr.bf16.mxu0 0
      %724 = vmatpush1.bf16.msra.mxu0 %v715
      %725 = vmatprep.subr.bf16.mxu0 0
      %726 = vmatpush1.bf16.msra.mxu0 0
      %727 = vmatprep.subr.bf16.mxu0 0
      %728 = vmatpush1.bf16.msra.mxu0 0
      %729 = vmatprep.subr.bf16.mxu0 0
      %730 = vmatpush1.bf16.msra.mxu0 0
      %731 = vmatprep.subr.bf16.mxu0 0
      %732 = vmatpush1.bf16.msra.mxu0 0
      %733 = vmatprep.subr.bf16.mxu0 0
      %734 = vmatpush1.bf16.msra.mxu0 0
      %735 = vmatprep.subr.bf16.mxu0 0
      %736 = vmatpush1.bf16.msra.mxu0 0
      %737 = vmatprep.subr.bf16.mxu0 0
      %738 = vmatpush1.bf16.msra.mxu0 0
      %739 = vmatprep.subr.bf16.mxu0 0
      %740 = vmatpush1.bf16.msra.mxu0 0
      %741 = vmatprep.subr.bf16.mxu0 0
      %742 = vmatpush1.bf16.msra.mxu0 0
      %743 = vmatprep.subr.bf16.mxu0 0
      %744 = vmatpush1.bf16.msra.mxu0 0
      %745 = vmatprep.subr.bf16.mxu0 0
      %746 = vmatpush1.bf16.msra.mxu0 0
      %747 = vmatprep.subr.bf16.mxu0 0
      %748 = vmatpush1.bf16.msra.mxu0 0
      %749 = vmatprep.subr.bf16.mxu0 0
      %750 = vmatpush1.bf16.msra.mxu0 0
      %751 = vmatprep.subr.bf16.mxu0 0
      %752 = vmatpush1.bf16.msra.mxu0 0
      %753 = vmatprep.mubr.bf16.mxu0 0
      %754 = vmatmul.mubr.bf16.gmra.mrb[0].mxu0 %v719
      %v755 = vpop.f32.mrb[0].mxu0
      %v756 = vadd.f32 %v704, %v755
      %v757 = vpop.f32.mrb[0].mxu0
      %v758 = vpop.f32.mrb[0].mxu0
      %v759 = vpop.f32.mrb[0].mxu0
      %760 = vdwg.mxu0
      %v761 = vadd.f32 %v756, %v302
      %v762 = vsel %vm320, %v761, 0.0
      %763 = vadd.xlane.f32.xlu0 %v762
      %v764 = vpop.xlane.xlu0 %763
      %v765 = vrcp.pop 32.0
      %v766 = vmul.f32 %v764, %v765
      %v767 = vsub.f32 %v761, %v766
      %v768 = vmul.f32 %v767, %v767
      %v769 = vsel %vm320, %v768, 0.0
      %770 = vadd.xlane.f32.xlu0 %v769
      %v771 = vpop.xlane.xlu0 %770
      %v772 = vmul.f32 %v771, %v765
      %v773 = vadd.f32 %v772, 1e-05
      %v774 = vrsqrt.pop %v773
      %v775 = vmul.f32 %v767, %v774
      %v776 = vld [vmem:[%s6] sm:$0x1]
      %v778 = vlaneseq
      %v779 = vshrl.u32 %v778, 7
      %v780 = vsub.s32 0, %v779
      %v781 = vrot.slane %v776, %v780
      %v783 = vmul.f32 %v775, %v781
      %v784 = vld [vmem:[%s7] sm:$0x1]
      %v786 = vlaneseq
      %v787 = vshrl.u32 %v786, 7
      %v788 = vsub.s32 0, %v787
      %v789 = vrot.slane %v784, %v788
      %v791 = vadd.f32 %v783, %v789
      %792 = vst.msk [vmem:[%s300] sm:$0xff] %vm320, %v791
      %p793 = scmp.lt.s32.totalorder %s19, 1
      %s794 = scalar_select %p793, %s19, 1
      %s795 = smul.addr %s794, 8
      %s796 = scalar_lea.vmem %s8, %s795
      // Predicated region
      $region60: #{gpt2_forward.5} parent=51 // pred_check
        %p797 = pneg %p210
      $region61: #{gpt2_forward.5} parent=51 // pred_check_branch
        %799 = sbr.rel (%p797) target = $region63
      $region62: #{gpt2_forward.5} parent=51 // pred_region
        _
      $region63: #{gpt2_forward.5} parent=51 // pred_fallthru
        _
    $region52: #{gpt2_forward.5} parent=5 // pred_fallthru
      _
    %p800 = scmp.le.s32.totalorder 2, %s14
    // Predicated region
    $region64: #{gpt2_forward.5} parent=5 // pred_check
      %p801 = pneg %p800
    $region65: #{gpt2_forward.5} parent=5 // pred_check_branch
      %803 = sbr.rel (%p801) target = $region67
    $region66: #{gpt2_forward.5} parent=5 // pred_region
      %s804 = ssub.s32 %s14, 2
      // Predicated region
      $region68: #{gpt2_forward.5} parent=66 // pred_check
        %p805 = pneg %p216
      $region69: #{gpt2_forward.5} parent=66 // pred_check_branch
        %807 = sbr.rel (%p805) target = $region71
      $region70: #{gpt2_forward.5} parent=66 // pred_region
        %p808 = scmp.lt.s32.totalorder %s20, 1
        %s809 = scalar_select %p808, %s20, 1
        %s810 = smul.addr %s809, 8
        %s811 = scalar_lea.vmem %s8, %s810
      $region71: #{gpt2_forward.5} parent=66 // pred_fallthru
        _
    $region67: #{gpt2_forward.5} parent=5 // pred_fallthru
      _
  $region6: #{gpt2_forward.5} parent=0 // loop_footer
    %s18 = sadd.s32 1, %s14
  $region7: #{gpt2_forward.5} parent=0 // loop_footer_branch
    %13 = sbr.rel target = $region3
  $region8: #{gpt2_forward.5} parent=0 // loop_exit
    _

</llo_original>
